<compile_context>
chip_gen: v5e
topology: v5e:2x2
jax: 0.10.0
libtpu: 0.0.40
codegen_flags: <defaults>
</compile_context>

<pallas_src>
import functools
import math

import jax
import jax.numpy as jnp
from jax.experimental import pallas as pl
from jax.experimental.pallas import tpu as pltpu


def _round_up(a: int, b: int) -> int:
    return (a + b - 1) // b * b


@functools.lru_cache(maxsize=1)
def _vmem_cap_bytes() -> int:
    """Per-core VMEM capacity minus headroom (chip-aware, conservative fallback)."""
    cap = 64 * 1024 * 1024  # conservative default = v7x per-TensorCore VMEM
    try:
        info = pltpu.get_tpu_info()
        cap = int(getattr(info, "vmem_capacity_bytes", cap))
    except Exception:
        pass
    return max(cap - 8 * 1024 * 1024, 32 * 1024 * 1024)  # leave Mosaic headroom


@functools.lru_cache(maxsize=1)
def _single_buffer_supported() -> bool:
    """Probe (once) whether BlockSpec(pipeline_mode=pl.Buffered(1)) lowers here."""
    try:
        def k(x_ref, w_ref, o_ref):
            o_ref[...] = x_ref[...] + w_ref[...]

        f = pl.pallas_call(
            k,
            out_shape=jax.ShapeDtypeStruct((16, 128), jnp.float32),
            grid=(2,),
            in_specs=[
                pl.BlockSpec((8, 128), lambda i: (i, 0)),
                pl.BlockSpec((8, 128), lambda i: (0, 0),
                             pipeline_mode=pl.Buffered(1)),
            ],
            out_specs=pl.BlockSpec((8, 128), lambda i: (i, 0)),
        )
        jax.block_until_ready(
            f(jnp.zeros((16, 128), jnp.float32), jnp.zeros((8, 128), jnp.float32)))
        return True
    except Exception:
        return False


# --------------------------------------------------------------------------
# Kernels
# --------------------------------------------------------------------------
def _reglu_resident_kernel(x_ref, wrg_ref, brg_ref, wm_ref, bm_ref, o_ref, *,
                           gate_dtype):
    """Resident-weight path: one wide fused matmul, gate, project back."""
    cdtype = wrg_ref.dtype
    gp = wrg_ref.shape[1] // 2
    x = x_ref[...]
    if x.dtype != cdtype:
        x = x.astype(cdtype)                       # in-register cast (hides under MXU)
    # Single wide MXU matmul for both gate projections, f32 accumulation.
    h = jnp.dot(x, wrg_ref[...], preferred_element_type=jnp.float32) + brg_ref[...]
    if gate_dtype is not None:                     # optional bf16 gate (v6e/v7x)
        h = h.astype(gate_dtype)
    g = jnp.maximum(h[:, :gp], 0) * h[:, gp:]      # ReLU gate (VPU)
    out = jnp.dot(g.astype(cdtype), wm_ref[...],
                  preferred_element_type=jnp.float32) + bm_ref[...]
    o_ref[...] = out.astype(o_ref.dtype)


def _reglu_ktiled_kernel(x_ref, wr_ref, br_ref, wg_ref, bg_ref, wm_ref, bm_ref,
                         o_ref, acc_ref, *, gate_dtype):
    """Gate-dim (Gp) reduction path: stream weight slabs, accumulate in VMEM f32."""
    cdtype = wr_ref.dtype
    k = pl.program_id(1)

    @pl.when(k == 0)
    def _init():
        acc_ref[...] = jnp.zeros_like(acc_ref)

    x = x_ref[...]
    if x.dtype != cdtype:
        x = x.astype(cdtype)
    hr = jnp.dot(x, wr_ref[...], preferred_element_type=jnp.float32) + br_ref[...]
    hg = jnp.dot(x, wg_ref[...], preferred_element_type=jnp.float32) + bg_ref[...]
    if gate_dtype is not None:
        hr = hr.astype(gate_dtype)
        hg = hg.astype(gate_dtype)
    g = jnp.maximum(hr, 0) * hg
    acc_ref[...] += jnp.dot(g.astype(cdtype), wm_ref[...],
                            preferred_element_type=jnp.float32)

    @pl.when(k == pl.num_programs(1) - 1)
    def _finalize():
        o_ref[...] = (acc_ref[...] + bm_ref[...]).astype(o_ref.dtype)


# --------------------------------------------------------------------------
# Parameter preparation (one-time; hoisted out of the per-forward path)
# --------------------------------------------------------------------------
def prepare_reglu_params(w_relu, b_relu, w_glu, b_glu, w_model, b_model, *,
                         matmul_dtype=None):
    """Pad feature dims to multiples of 128, fuse [W_relu | W_glu], cast once.

    Weight layout is (in_features, out_features) — the transpose of
    torch.nn.Linear.weight.  Zero padding is mathematically inert.
    """
    D, G = w_relu.shape
    assert w_glu.shape == (D, G) and w_model.shape == (G, D)
    cdtype = (jnp.dtype(matmul_dtype) if matmul_dtype is not None
              else jnp.dtype(w_relu.dtype))
    # TODO(synk): optional int8 (v5e/v6e) / fp8 (v7x) weight-quantized path for
    # weight-streaming-bound decode regimes.
    dp, gp = _round_up(D, 128), _round_up(G, 128)

    def pad2(w, r, c):
        return jnp.pad(w, ((0, r - w.shape[0]), (0, c - w.shape[1])))

    def pad1(b, n):
        return jnp.pad(b, (0, n - b.shape[0]))

    w_rg = jnp.concatenate([pad2(w_relu, dp, gp), pad2(w_glu, dp, gp)],
                           axis=1).astype(cdtype)                 # (Dp, 2*Gp)
    b_rg = jnp.concatenate([pad1(b_relu, gp), pad1(b_glu, gp)]
                           ).reshape(1, 2 * gp).astype(jnp.float32)
    w_m = pad2(w_model, gp, dp).astype(cdtype)                    # (Gp, Dp)
    b_m = pad1(b_model, dp).reshape(1, dp).astype(jnp.float32)    # (1, Dp)
    return {"w_rg": w_rg, "b_rg": b_rg, "w_m": w_m, "b_m": b_m}


# --------------------------------------------------------------------------
# Forward
# --------------------------------------------------------------------------
@functools.partial(
    jax.jit,
    static_argnames=("tm", "tk", "gate_dtype", "force_ktile",
                     "single_buffer_weights"))
def _reglu_apply(x, w_rg, b_rg, w_m, b_m, *, tm, tk, gate_dtype, force_ktile,
                 single_buffer_weights):
    orig_shape = x.shape
    D = orig_shape[-1]
    N = int(math.prod(orig_shape[:-1])) if len(orig_shape) > 1 else 1
    Dp, two_gp = w_rg.shape
    Gp = two_gp // 2
    assert _round_up(D, 128) == Dp, "params prepared for a different dim_model"

    out_dtype = x.dtype
    cdtype = w_rg.dtype
    gate_np = None if gate_dtype is None else jnp.dtype(gate_dtype)

    x_bpe = jnp.dtype(x.dtype).itemsize
    o_bpe = jnp.dtype(out_dtype).itemsize
    c_bpe = jnp.dtype(cdtype).itemsize
    w_buf = 1 if single_buffer_weights else 2

    # Row tile rounded to the native sublane packing (8 f32 / 16 bf16 / 32 i8).
    sub = max(8, 32 // min(x_bpe, o_bpe, c_bpe))
    cap = _vmem_cap_bytes()

    def resident_bytes(t):
        return (2 * t * Dp * x_bpe + 2 * t * Dp * o_bpe          # streamed x / out
                + w_buf * (Dp * 2 * Gp + Gp * Dp) * c_bpe        # resident weights
                + w_buf * (2 * Gp + Dp) * 4                      # resident biases
                + t * Dp * c_bpe                                 # x cast
                + t * 2 * Gp * 4 + t * Gp * 4 + t * Gp * c_bpe   # h / gate / cast
                + t * Dp * 4)                                    # f32 out pre-cast

    def ktiled_bytes(t, kt):
        return (2 * t * Dp * x_bpe + 2 * t * Dp * o_bpe
                + 2 * 3 * Dp * kt * c_bpe                        # Wr/Wg/Wm slabs x2
                + 2 * 2 * kt * 4 + Dp * 4                        # bias slabs
                + t * Dp * 4                                     # f32 accumulator
                + t * Dp * c_bpe                                 # x cast
                + t * 2 * kt * 4 + t * kt * 4 + t * kt * c_bpe   # hr/hg/gate/cast
                + t * Dp * 4)                                    # f32 out pre-cast

    tm_eff = max(sub, min(_round_up(tm, sub), _round_up(max(N, 1), sub)))
    use_ktile = bool(force_ktile) or resident_bytes(min(tm_eff, 256)) > cap

    if not use_ktile:
        while tm_eff > sub and resident_bytes(tm_eff) > cap:
            tm_eff = max(sub, _round_up(tm_eff // 2, sub))
        tk_eff, n_k = Gp, 1
        vmem_est = resident_bytes(tm_eff)
    else:
        if tk is None:
            tk_eff = next(t for t in (512, 384, 256, 128) if Gp % t == 0)
        else:
            tk_eff = int(tk)
            assert Gp % tk_eff == 0 and tk_eff % 128 == 0
        while tm_eff > sub and ktiled_bytes(tm_eff, tk_eff) > cap:
            tm_eff = max(sub, _round_up(tm_eff // 2, sub))
        n_k = Gp // tk_eff
        vmem_est = ktiled_bytes(tm_eff, tk_eff)

    n_pad = _round_up(max(N, 1), tm_eff)
    grid_rows = n_pad // tm_eff

    # Activations: avoid materializing a padded copy unless actually needed.
    x2 = x.reshape(-1, D)
    if n_pad != N or Dp != D:
        x2 = jnp.pad(x2, ((0, n_pad - N), (0, Dp - D)))

    vmem_limit = int(min(max(vmem_est * 5 // 4 + (2 << 20), 32 << 20), cap))

    flops = 2 * n_pad * Dp * 2 * Gp + 2 * n_pad * Gp * Dp
    bytes_acc = (n_pad * Dp * (x_bpe + o_bpe)
                 + (Dp * 2 * Gp + Gp * Dp) * c_bpe + (2 * Gp + Dp) * 4)
    cost = pl.CostEstimate(flops=int(flops), transcendentals=0,
                           bytes_accessed=int(bytes_acc))

    # Gate megacore split for tiny N (single grid step -> no duplicated weight DMA).
    row_sem = "parallel" if grid_rows > 1 else "arbitrary"

    if not use_ktile:
        def const_spec(shape):
            if single_buffer_weights:
                return pl.BlockSpec(shape, lambda i: (0, 0),
                                    pipeline_mode=pl.Buffered(1))
            return pl.BlockSpec(shape, lambda i: (0, 0))

        kernel = functools.partial(_reglu_resident_kernel, gate_dtype=gate_np)
        out = pl.pallas_call(
            kernel,
            out_shape=jax.ShapeDtypeStruct((n_pad, Dp), out_dtype),
            grid_spec=pltpu.PrefetchScalarGridSpec(
                num_scalar_prefetch=0,
                grid=(grid_rows,),
                in_specs=[
                    pl.BlockSpec((tm_eff, Dp), lambda i: (i, 0)),   # streamed rows
                    const_spec((Dp, 2 * Gp)),                       # [Wr|Wg] resident
                    const_spec((1, 2 * Gp)),                        # fused gate bias
                    const_spec((Gp, Dp)),                           # W_model
                    const_spec((1, Dp)),                            # b_model
                ],
                out_specs=pl.BlockSpec((tm_eff, Dp), lambda i: (i, 0)),
            ),
            compiler_params=pltpu.CompilerParams(
                dimension_semantics=(row_sem,), vmem_limit_bytes=vmem_limit),
            cost_estimate=cost,
        )(x2, w_rg, b_rg, w_m, b_m)
    else:
        def const_spec2(shape):
            if single_buffer_weights:
                return pl.BlockSpec(shape, lambda i, k: (0, 0),
                                    pipeline_mode=pl.Buffered(1))
            return pl.BlockSpec(shape, lambda i, k: (0, 0))

        kernel = functools.partial(_reglu_ktiled_kernel, gate_dtype=gate_np)
        out = pl.pallas_call(
            kernel,
            out_shape=jax.ShapeDtypeStruct((n_pad, Dp), out_dtype),
            grid_spec=pltpu.PrefetchScalarGridSpec(
                num_scalar_prefetch=0,
                grid=(grid_rows, n_k),
                in_specs=[
                    pl.BlockSpec((tm_eff, Dp), lambda i, k: (i, 0)),         # x rows
                    pl.BlockSpec((Dp, tk_eff), lambda i, k: (0, k)),         # W_relu slab
                    pl.BlockSpec((1, tk_eff), lambda i, k: (0, k)),          # b_relu slab
                    pl.BlockSpec((Dp, tk_eff), lambda i, k: (0, n_k + k)),   # W_glu slab
                    pl.BlockSpec((1, tk_eff), lambda i, k: (0, n_k + k)),    # b_glu slab
                    pl.BlockSpec((tk_eff, Dp), lambda i, k: (k, 0)),         # W_model slab
                    const_spec2((1, Dp)),                                    # b_model
                ],
                out_specs=pl.BlockSpec((tm_eff, Dp), lambda i, k: (i, 0)),
                scratch_shapes=[pltpu.VMEM((tm_eff, Dp), jnp.float32)],
            ),
            compiler_params=pltpu.CompilerParams(
                dimension_semantics=(row_sem, "arbitrary"),
                vmem_limit_bytes=vmem_limit),
            cost_estimate=cost,
        )(x2, w_rg, b_rg, w_rg, b_rg, w_m, b_m)   # fused array passed twice (Wr / Wg views)

    return out[:N, :D].reshape(orig_shape)


def reglu_apply(x, params, *, tm=512, tk=None, gate_dtype=None, force_ktile=False):
    """ReGLU forward using params prepared by prepare_reglu_params()."""
    single_buf = _single_buffer_supported()
    return _reglu_apply(
        x, params["w_rg"], params["b_rg"], params["w_m"], params["b_m"],
        tm=int(tm), tk=None if tk is None else int(tk),
        gate_dtype=None if gate_dtype is None else jnp.dtype(gate_dtype).name,
        force_ktile=bool(force_ktile), single_buffer_weights=single_buf)


def reglu_pallas(x, w_relu, b_relu, w_glu, b_glu, w_model, b_model,
                 *, matmul_dtype=None, **kw):
    """One-shot convenience: prepare + apply. Prefer caching prepare_reglu_params."""
    params = prepare_reglu_params(w_relu, b_relu, w_glu, b_glu, w_model, b_model,
                                  matmul_dtype=matmul_dtype)
    return reglu_apply(x, params, **kw)


def reglu_ref(x, w_relu, b_relu, w_glu, b_glu, w_model, b_model):
    h = jnp.maximum(x @ w_relu + b_relu, 0.0) * (x @ w_glu + b_glu)
    return h @ w_model + b_model


if __name__ == "__main__":
    jax.config.update("jax_default_matmul_precision", "highest")
    key = jax.random.PRNGKey(0)

    def init_linear(k, fan_in, fan_out):
        kw, kb = jax.random.split(k)
        bound = 1.0 / float(fan_in) ** 0.5
        w = jax.random.uniform(kw, (fan_in, fan_out), jnp.float32, -bound, bound)
        b = jax.random.uniform(kb, (fan_out,), jnp.float32, -bound, bound)
        return w, b

    # Test 1: module-scale shapes (dim_model=32, dim_ffn=48 -> dim_glu=32),
    # resident-weight path.
    dim_model, dim_ffn = 32, 48
    dim_glu = 2 * dim_ffn // 3
    B, S = 2, 8
    k_x, k1, k2, k3, key = jax.random.split(key, 5)
    x = jax.random.normal(k_x, (B, S, dim_model), jnp.float32)
    w_relu, b_relu = init_linear(k1, dim_model, dim_glu)
    w_glu, b_glu = init_linear(k2, dim_model, dim_glu)
    w_model, b_model = init_linear(k3, dim_glu, dim_model)

    params = prepare_reglu_params(w_relu, b_relu, w_glu, b_glu, w_model, b_model)
    out = jax.block_until_ready(reglu_apply(x, params))
    ref = reglu_ref(x, w_relu, b_relu, w_glu, b_glu, w_model, b_model)
    assert out.shape == x.shape
    err = float(jnp.max(jnp.abs(out - ref)))
    assert err < 1e-4, f"resident path max err {err}"

    # Test 2: exercise the Gp-reduction (K-tiled) path used for large G / v7x,
    # forced on small shapes so it is validated too.
    dim_model2, dim_glu2 = 256, 512
    B2, S2 = 2, 128
    k_x, k1, k2, k3, key = jax.random.split(key, 5)
    x2 = jax.random.normal(k_x, (B2, S2, dim_model2), jnp.float32)
    w_relu2, b_relu2 = init_linear(k1, dim_model2, dim_glu2)
    w_glu2, b_glu2 = init_linear(k2, dim_model2, dim_glu2)
    w_model2, b_model2 = init_linear(k3, dim_glu2, dim_model2)

    params2 = prepare_reglu_params(w_relu2, b_relu2, w_glu2, b_glu2,
                                   w_model2, b_model2)
    out2 = jax.block_until_ready(
        reglu_apply(x2, params2, tm=128, tk=128, force_ktile=True))
    ref2 = reglu_ref(x2, w_relu2, b_relu2, w_glu2, b_glu2, w_model2, b_model2)
    assert out2.shape == x2.shape
    err2 = float(jnp.max(jnp.abs(out2 - ref2)))
    assert err2 < 1e-3, f"k-tiled path max err {err2}"

    print("KERNEL_OK")
</pallas_src>

<mosaic_0001>
module attributes {stable_mosaic.version = 11 : i64} {
  func.func @k(%arg0: i32, %arg1: memref<8x128xf32, #tpu.memory_space<vmem>>, %arg2: memref<8x128xf32, #tpu.memory_space<vmem>>, %arg3: memref<8x128xf32, #tpu.memory_space<vmem>>) attributes {dimension_semantics = [#tpu.dimension_semantics<arbitrary>], iteration_bounds = array<i64: 2>, scalar_prefetch = 0 : i64, scratch_operands = 0 : i64, tpu.core_type = #tpu.core_type<tc>, window_params = [{transform_indices = @transform_0, window_bounds = array<i64: 8, 128>}, {pipeline_mode = #tpu.pipeline_mode<synchronous>, transform_indices = @transform_1, window_bounds = array<i64: 8, 128>}, {transform_indices = @transform_2, window_bounds = array<i64: 8, 128>}]} {
    %c0 = arith.constant 0 : index
    %c0_0 = arith.constant 0 : index
    %0 = vector.load %arg1[%c0, %c0_0] : memref<8x128xf32, #tpu.memory_space<vmem>>, vector<8x128xf32>
    %c0_1 = arith.constant 0 : index
    %c0_2 = arith.constant 0 : index
    %1 = vector.load %arg2[%c0_1, %c0_2] : memref<8x128xf32, #tpu.memory_space<vmem>>, vector<8x128xf32>
    %2 = arith.addf %0, %1 : vector<8x128xf32>
    %c0_3 = arith.constant 0 : index
    %c0_4 = arith.constant 0 : index
    %3 = vector.load %arg3[%c0_3, %c0_4] : memref<8x128xf32, #tpu.memory_space<vmem>>, vector<8x128xf32>
    tpu.vector_store %arg3[%c0_3, %c0_4], %2 {strides = array<i32>} : memref<8x128xf32, #tpu.memory_space<vmem>>, vector<8x128xf32>,
    return
  }
  func.func @transform_0(%arg0: i32) -> (i32, i32) {
    %c0_i32 = arith.constant 0 : i32
    %c0_i32_0 = arith.constant 0 : i32
    return %arg0, %c0_i32 : i32, i32
  }
  func.func @transform_1(%arg0: i32) -> (i32, i32) {
    %c0_i32 = arith.constant 0 : i32
    %c0_i32_0 = arith.constant 0 : i32
    %c0_i32_1 = arith.constant 0 : i32
    return %c0_i32, %c0_i32_0 : i32, i32
  }
  func.func @transform_2(%arg0: i32) -> (i32, i32) {
    %c0_i32 = arith.constant 0 : i32
    %c0_i32_0 = arith.constant 0 : i32
    return %arg0, %c0_i32 : i32, i32
  }
}

module attributes {stable_mosaic.version = 11 : i64} {
  func.func @_reglu_resident_kernel(%arg0: i32, %arg1: memref<16x128xf32, #tpu.memory_space<vmem>>, %arg2: memref<128x256xf32, #tpu.memory_space<vmem>>, %arg3: memref<1x256xf32, #tpu.memory_space<vmem>>, %arg4: memref<128x128xf32, #tpu.memory_space<vmem>>, %arg5: memref<1x128xf32, #tpu.memory_space<vmem>>, %arg6: memref<16x128xf32, #tpu.memory_space<vmem>>) attributes {dimension_semantics = [#tpu.dimension_semantics<arbitrary>], iteration_bounds = array<i64: 1>, scalar_prefetch = 0 : i64, scratch_operands = 0 : i64, tpu.core_type = #tpu.core_type<tc>, window_params = [{transform_indices = @transform_0, window_bounds = array<i64: 16, 128>}, {pipeline_mode = #tpu.pipeline_mode<synchronous>, transform_indices = @transform_1, window_bounds = array<i64: 128, 256>}, {pipeline_mode = #tpu.pipeline_mode<synchronous>, transform_indices = @transform_2, window_bounds = array<i64: 1, 256>}, {pipeline_mode = #tpu.pipeline_mode<synchronous>, transform_indices = @transform_3, window_bounds = array<i64: 128, 128>}, {pipeline_mode = #tpu.pipeline_mode<synchronous>, transform_indices = @transform_4, window_bounds = array<i64: 1, 128>}, {transform_indices = @transform_5, window_bounds = array<i64: 16, 128>}]} {
    %c0 = arith.constant 0 : index
    %c0_0 = arith.constant 0 : index
    %0 = vector.load %arg1[%c0, %c0_0] : memref<16x128xf32, #tpu.memory_space<vmem>>, vector<16x128xf32>
    %c0_1 = arith.constant 0 : index
    %c0_2 = arith.constant 0 : index
    %1 = vector.load %arg2[%c0_1, %c0_2] : memref<128x256xf32, #tpu.memory_space<vmem>>, vector<128x256xf32>
    %cst = arith.constant dense<0.000000e+00> : vector<16x256xf32>
    %2 = tpu.matmul %0, %1, %cst {dimension_numbers = #tpu.dot_dimension_numbers<[1], [0], [0], [1], [0, 0, 1, 1], [], []>, precision = #tpu.contract_precision<fp32>} : vector<16x128xf32>, vector<128x256xf32>, vector<16x256xf32> -> vector<16x256xf32>
    %c0_3 = arith.constant 0 : index
    %c0_4 = arith.constant 0 : index
    %3 = vector.load %arg3[%c0_3, %c0_4] : memref<1x256xf32, #tpu.memory_space<vmem>>, vector<1x256xf32>
    %4 = vector.broadcast %3 : vector<1x256xf32> to vector<16x256xf32>
    %5 = arith.addf %2, %4 : vector<16x256xf32>
    %6 = vector.extract_strided_slice %5 {offsets = [0, 0], sizes = [16, 128], strides = [1, 1]} : vector<16x256xf32> to vector<16x128xf32>
    %cst_5 = arith.constant 0.000000e+00 : f32
    %7 = vector.broadcast %cst_5 : f32 to vector<16x128xf32>
    %8 = arith.maximumf %6, %7 : vector<16x128xf32>
    %9 = vector.extract_strided_slice %5 {offsets = [0, 128], sizes = [16, 128], strides = [1, 1]} : vector<16x256xf32> to vector<16x128xf32>
    %10 = arith.mulf %8, %9 : vector<16x128xf32>
    %c0_6 = arith.constant 0 : index
    %c0_7 = arith.constant 0 : index
    %11 = vector.load %arg4[%c0_6, %c0_7] : memref<128x128xf32, #tpu.memory_space<vmem>>, vector<128x128xf32>
    %cst_8 = arith.constant dense<0.000000e+00> : vector<16x128xf32>
    %12 = tpu.matmul %10, %11, %cst_8 {dimension_numbers = #tpu.dot_dimension_numbers<[1], [0], [0], [1], [0, 0, 1, 1], [], []>, precision = #tpu.contract_precision<fp32>} : vector<16x128xf32>, vector<128x128xf32>, vector<16x128xf32> -> vector<16x128xf32>
    %c0_9 = arith.constant 0 : index
    %c0_10 = arith.constant 0 : index
    %13 = vector.load %arg5[%c0_9, %c0_10] : memref<1x128xf32, #tpu.memory_space<vmem>>, vector<1x128xf32>
    %14 = vector.broadcast %13 : vector<1x128xf32> to vector<16x128xf32>
    %15 = arith.addf %12, %14 : vector<16x128xf32>
    %c0_11 = arith.constant 0 : index
    %c0_12 = arith.constant 0 : index
    %16 = vector.load %arg6[%c0_11, %c0_12] : memref<16x128xf32, #tpu.memory_space<vmem>>, vector<16x128xf32>
    tpu.vector_store %arg6[%c0_11, %c0_12], %15 {strides = array<i32>} : memref<16x128xf32, #tpu.memory_space<vmem>>, vector<16x128xf32>,
    return
  }
  func.func @transform_0(%arg0: i32) -> (i32, i32) {
    %c0_i32 = arith.constant 0 : i32
    %c0_i32_0 = arith.constant 0 : i32
    return %arg0, %c0_i32 : i32, i32
  }
  func.func @transform_1(%arg0: i32) -> (i32, i32) {
    %c0_i32 = arith.constant 0 : i32
    %c0_i32_0 = arith.constant 0 : i32
    %c0_i32_1 = arith.constant 0 : i32
    return %c0_i32, %c0_i32_0 : i32, i32
  }
  func.func @transform_2(%arg0: i32) -> (i32, i32) {
    %c0_i32 = arith.constant 0 : i32
    %c0_i32_0 = arith.constant 0 : i32
    %c0_i32_1 = arith.constant 0 : i32
    return %c0_i32, %c0_i32_0 : i32, i32
  }
  func.func @transform_3(%arg0: i32) -> (i32, i32) {
    %c0_i32 = arith.constant 0 : i32
    %c0_i32_0 = arith.constant 0 : i32
    %c0_i32_1 = arith.constant 0 : i32
    return %c0_i32, %c0_i32_0 : i32, i32
  }
  func.func @transform_4(%arg0: i32) -> (i32, i32) {
    %c0_i32 = arith.constant 0 : i32
    %c0_i32_0 = arith.constant 0 : i32
    %c0_i32_1 = arith.constant 0 : i32
    return %c0_i32, %c0_i32_0 : i32, i32
  }
  func.func @transform_5(%arg0: i32) -> (i32, i32) {
    %c0_i32 = arith.constant 0 : i32
    %c0_i32_0 = arith.constant 0 : i32
    return %arg0, %c0_i32 : i32, i32
  }
}

</mosaic_0001>

<llo_original>
// kernel: tpu_custom_call.1
$region0: #{tpu_custom_call.1}
  #allocation0 [shape = 'u32[]', space=smem, size = 0x4, offset = 0x4, fixed_abs, tag = 'smem constant byte address 0x4 - core index']
  #allocation1 [shape = 'u32[72,128]{1,0:T(1,128)}', space=vmem, size = 0x9000, scoped, tag = 'internal scratch']
  %s0 = inlined_call_operand.hbm [shape: f32[16,128], index: 0, kind: input, shape index: {}]
  %s1 = inlined_call_operand.hbm [shape: f32[8,128], index: 1, kind: input, shape index: {}]
  %s2 = inlined_call_operand.hbm [shape: f32[16,128], index: 2, kind: output, shape index: {}]
  %s3 = sld [smem:[#allocation0]]
  $region49: #{tpu_custom_call.1} parent=0
    _
  %s5 = ssub.s32 1, %s3
  %s6 = scalar_select 0, %s5, %s3
  $region1: #{tpu_custom_call.1} parent=0
    #allocation2 [shape = 'u8[8192]{0}', space=vmem, size = 0x2000, scoped, tag = 'input window, operand 0']
    #allocation3 [shape = 's32[2]{0}', space=sflag, size = 0x8, scoped, tag = 'scoped memory for tpu_custom_call.1']
    #allocation4 [shape = 's32[2]{0}', space=sflag, size = 0x8, scoped, tag = 'scoped memory for tpu_custom_call.1']
    #allocation5 [shape = 'u8[4096]{0}', space=vmem, size = 0x1000, scoped, tag = 'input window, operand 1, single buffered']
    #allocation6 [shape = 's32[1]{0}', space=sflag, size = 0x4, scoped, tag = 'scoped memory for tpu_custom_call.1']
    #allocation7 [shape = 'u8[8192]{0}', space=vmem, size = 0x2000, scoped, tag = 'output window, operand 0']
    %7 = vsyncpa [#allocation3], 0
    %s8 = scalar_lea.sflag [#allocation3], 1
    %9 = vsyncpa %s8, 0
    %10 = vsyncpa [#allocation6], 0
    %11 = vsyncpa [#allocation4], 0
    %s12 = scalar_lea.sflag [#allocation4], 1
    %13 = vsyncpa %s12, 0
    loop: start=0, step=1, limit=4
    $region2: #{tpu_custom_call.1} parent=1 // loop_pre_header
      _
    $region3: #{tpu_custom_call.1} parent=1 // loop_header
      %s15 = sphi 0, %s19
      %p16 = scmp.ge.s32.totalorder %s15, 4
      %s25 = sphi 0, %s27
      %s28 = sphi 0, %s25
      %s29 = sphi 0, %s28
      %s45 = sphi 0, %s29
      %s49 = sphi 0, %s49
      %s51 = sphi 0, %s49
      %s52 = sphi 0, %s51
      %s66 = sphi 0, %s52
      %s72 = sphi 0, %s74
      %s75 = sphi 0, %s72
      %s76 = sphi 0, %s75
      %s92 = sphi 0, %s76
    $region4: #{tpu_custom_call.1} parent=1 // loop_header_branch
      %18 = sbr.rel (%p16) target = $region8
    $region5: #{tpu_custom_call.1} parent=1 // loop_body
      %s20 = ssub.s32 %s15, 1
      %s21 = ssub.s32 %s15, 2
      %s22 = sadd.s32 %s15, 1
      %s23 = ssub.s32 %s15, %s22
      %p24 = scmp.eq.s32.totalorder %s23, 0
      %s26 = sadd.s32 %s25, 1
      %s27 = scalar_select %p24, %s25, %s26
      %p30 = pneg %p24
      %p31 = scmp.eq.s32.totalorder %s15, 1
      %p32 = por %p30, %p31
      %p33 = scmp.ne.s32.totalorder %s25, %s28
      %p34 = scmp.eq.s32.totalorder %s15, 0
      %p35 = por %p33, %p34
      %p36 = scmp.ne.s32.totalorder %s25, %s28
      %p37 = scmp.eq.s32.totalorder %s20, 1
      %p38 = por %p36, %p37
      %p39 = scmp.ne.s32.totalorder %s28, %s29
      %p40 = scmp.eq.s32.totalorder %s20, 0
      %p41 = por %p39, %p40
      %p42 = scmp.ne.s32.totalorder %s28, %s29
      %p43 = scmp.eq.s32.totalorder %s21, 1
      %p44 = por %p42, %p43
      %p46 = scmp.ne.s32.totalorder %s29, %s45
      %p47 = scmp.eq.s32.totalorder %s21, 0
      %p48 = por %p46, %p47
      %s50 = sadd.s32 %s49, 1
      %p53 = scmp.eq.s32.totalorder %s15, 1
      %p54 = scmp.ne.s32.totalorder %s49, %s51
      %p55 = scmp.eq.s32.totalorder %s15, 0
      %p56 = por %p54, %p55
      %p57 = scmp.ne.s32.totalorder %s49, %s51
      %p58 = scmp.eq.s32.totalorder %s20, 1
      %p59 = por %p57, %p58
      %p60 = scmp.ne.s32.totalorder %s51, %s52
      %p61 = scmp.eq.s32.totalorder %s20, 0
      %p62 = por %p60, %p61
      %p63 = scmp.ne.s32.totalorder %s51, %s52
      %p64 = scmp.eq.s32.totalorder %s21, 1
      %p65 = por %p63, %p64
      %p67 = scmp.ne.s32.totalorder %s52, %s66
      %p68 = scmp.eq.s32.totalorder %s21, 0
      %p69 = por %p67, %p68
      %s70 = ssub.s32 %s15, %s22
      %p71 = scmp.eq.s32.totalorder %s70, 0
      %s73 = sadd.s32 %s72, 1
      %s74 = scalar_select %p71, %s72, %s73
      %p77 = pneg %p71
      %p78 = scmp.eq.s32.totalorder %s15, 1
      %p79 = por %p77, %p78
      %p80 = scmp.ne.s32.totalorder %s72, %s75
      %p81 = scmp.eq.s32.totalorder %s15, 0
      %p82 = por %p80, %p81
      %p83 = scmp.ne.s32.totalorder %s72, %s75
      %p84 = scmp.eq.s32.totalorder %s20, 1
      %p85 = por %p83, %p84
      %p86 = scmp.ne.s32.totalorder %s75, %s76
      %p87 = scmp.eq.s32.totalorder %s20, 0
      %p88 = por %p86, %p87
      %p89 = scmp.ne.s32.totalorder %s75, %s76
      %p90 = scmp.eq.s32.totalorder %s21, 1
      %p91 = por %p89, %p90
      %p93 = scmp.ne.s32.totalorder %s76, %s92
      %p94 = scmp.eq.s32.totalorder %s21, 0
      %p95 = por %p93, %p94
      %p96 = scmp.le.s32.totalorder 1, %s15
      %p97 = scmp.lt.s32.totalorder %s15, 3
      %p98 = pnand %p96, %p97
      %p99 = pneg %p98
      // Predicated region
      $region9: #{tpu_custom_call.1} parent=5 // pred_check
        _
      $region10: #{tpu_custom_call.1} parent=5 // pred_check_branch
        %101 = sbr.rel (%p98) target = $region12
      $region11: #{tpu_custom_call.1} parent=5 // pred_region
        %s102 = ssub.s32 %s15, 1
        // Predicated region
        $region13: #{tpu_custom_call.1} parent=11 // pred_check
          %p103 = pneg %p62
        $region14: #{tpu_custom_call.1} parent=11 // pred_check_branch
          %105 = sbr.rel (%p103) target = $region16
        $region15: #{tpu_custom_call.1} parent=11 // pred_region
          %107 = vsyncadd [#allocation6], 0
          %s109 = sshll.u32 %s1, 4
          %s110 = int_to_ptr.hbm [resolvable:$true] %s109
          %s111 = sshll.u32 [#allocation5], 4
          %s112 = int_to_ptr.vmem [resolvable:$true] %s111
          %114 = dma.hbm_to_vmem [thread:$0]  %s110, 128, %s112, [#allocation6]
        $region16: #{tpu_custom_call.1} parent=11 // pred_fallthru
          _
      $region12: #{tpu_custom_call.1} parent=5 // pred_fallthru
        _
      %p115 = scmp.lt.s32.totalorder %s15, 2
      // Predicated region
      $region17: #{tpu_custom_call.1} parent=5 // pred_check
        %p116 = pneg %p115
      $region18: #{tpu_custom_call.1} parent=5 // pred_check_branch
        %118 = sbr.rel (%p116) target = $region20
      $region19: #{tpu_custom_call.1} parent=5 // pred_region
        // Predicated region
        $region21: #{tpu_custom_call.1} parent=19 // pred_check
          %p119 = pneg %p35
        $region22: #{tpu_custom_call.1} parent=19 // pred_check_branch
          %121 = sbr.rel (%p119) target = $region24
        $region23: #{tpu_custom_call.1} parent=19 // pred_region
          %s122 = sand.u32 %s25, 1
          %s123 = scalar_lea.sflag [#allocation3], %s122
          %s124 = sand.u32 %s25, 1
          %s125 = smul.addr %s124, 8
          %s126 = scalar_lea.vmem [#allocation2], %s125
          %128 = vsyncadd %s123, 0
          %s129 = smul.addr %s15, 8
          %s130 = scalar_lea.hbm %s0, %s129
          %s132 = sshll.u32 %s130, 4
          %s133 = int_to_ptr.hbm [resolvable:$true] %s132
          %s134 = sshll.u32 %s126, 4
          %s135 = int_to_ptr.vmem [resolvable:$true] %s134
          %137 = dma.hbm_to_vmem [thread:$0]  %s133, 128, %s135, %s123
        $region24: #{tpu_custom_call.1} parent=19 // pred_fallthru
          _
      $region20: #{tpu_custom_call.1} parent=5 // pred_fallthru
        _
      %p138 = scmp.le.s32.totalorder 1, %s15
      %p139 = scmp.lt.s32.totalorder %s15, 3
      %p140 = pnand %p138, %p139
      %p141 = pneg %p140
      // Predicated region
      $region25: #{tpu_custom_call.1} parent=5 // pred_check
        _
      $region26: #{tpu_custom_call.1} parent=5 // pred_check_branch
        %143 = sbr.rel (%p140) target = $region28
      $region27: #{tpu_custom_call.1} parent=5 // pred_region
        %s144 = ssub.s32 %s15, 1
        %s145 = sand.u32 %s28, 1
        %s146 = scalar_lea.sflag [#allocation3], %s145
        %s147 = sand.u32 %s28, 1
        %s148 = smul.addr %s147, 8
        %s149 = scalar_lea.vmem [#allocation2], %s148
        // Predicated region
        $region29: #{tpu_custom_call.1} parent=27 // pred_check
          %p150 = pneg %p41
        $region30: #{tpu_custom_call.1} parent=27 // pred_check_branch
          %152 = sbr.rel (%p150) target = $region32
        $region31: #{tpu_custom_call.1} parent=27 // pred_region
          %154 = dma.done %s146, 128
        $region32: #{tpu_custom_call.1} parent=27 // pred_fallthru
          _
        // Predicated region
        $region33: #{tpu_custom_call.1} parent=27 // pred_check
          %p155 = pneg %p62
        $region34: #{tpu_custom_call.1} parent=27 // pred_check_branch
          %157 = sbr.rel (%p155) target = $region36
        $region35: #{tpu_custom_call.1} parent=27 // pred_region
          %159 = dma.done [#allocation6], 128
        $region36: #{tpu_custom_call.1} parent=27 // pred_fallthru
          _
        %s160 = sand.u32 %s28, 1
        %s161 = scalar_lea.sflag [#allocation3], %s160
        %s162 = sand.u32 %s28, 1
        %s163 = smul.addr %s162, 8
        %s164 = scalar_lea.vmem [#allocation2], %s163
        %p165 = pneg %p41
        %p166 = pneg %p38
        %p167 = pneg %p62
        %p168 = pneg %p59
        %p169 = pneg %p88
        %p170 = pneg %p85
        %s171 = sand.u32 %s75, 1
        %s172 = scalar_lea.sflag [#allocation4], %s171
        %s173 = sand.u32 %s75, 1
        %s174 = smul.addr %s173, 8
        %s175 = scalar_lea.vmem [#allocation7], %s174
        %v176 = vld [vmem:[%s149] sm:$0xff]
        %v177 = vld [vmem:[#allocation5] sm:$0xff]
        %v178 = vadd.f32 %v176, %v177
        %179 = vst [vmem:[%s175] sm:$0xff] %v178
        %s180 = sand.u32 %s75, 1
        %s181 = scalar_lea.sflag [#allocation4], %s180
        %s182 = sand.u32 %s75, 1
        %s183 = smul.addr %s182, 8
        %s184 = scalar_lea.vmem [#allocation7], %s183
        // Predicated region
        $region37: #{tpu_custom_call.1} parent=27 // pred_check
          %p185 = pneg %p85
        $region38: #{tpu_custom_call.1} parent=27 // pred_check_branch
          %187 = sbr.rel (%p185) target = $region40
        $region39: #{tpu_custom_call.1} parent=27 // pred_region
          %189 = vsyncadd %s181, 0
          %s190 = smul.addr %s20, 8
          %s191 = scalar_lea.hbm %s2, %s190
          %s193 = sshll.u32 %s184, 4
          %s194 = int_to_ptr.vmem [resolvable:$true] %s193
          %s195 = sshll.u32 %s191, 4
          %s196 = int_to_ptr.hbm [resolvable:$true] %s195
          %198 = dma.vmem_to_hbm [thread:$0]  %s194, 128, %s196, %s181
        $region40: #{tpu_custom_call.1} parent=27 // pred_fallthru
          _
      $region28: #{tpu_custom_call.1} parent=5 // pred_fallthru
        _
      %p199 = scmp.le.s32.totalorder 2, %s15
      // Predicated region
      $region41: #{tpu_custom_call.1} parent=5 // pred_check
        %p200 = pneg %p199
      $region42: #{tpu_custom_call.1} parent=5 // pred_check_branch
        %202 = sbr.rel (%p200) target = $region44
      $region43: #{tpu_custom_call.1} parent=5 // pred_region
        %s203 = ssub.s32 %s15, 2
        // Predicated region
        $region45: #{tpu_custom_call.1} parent=43 // pred_check
          %p204 = pneg %p91
        $region46: #{tpu_custom_call.1} parent=43 // pred_check_branch
          %206 = sbr.rel (%p204) target = $region48
        $region47: #{tpu_custom_call.1} parent=43 // pred_region
          %s207 = sand.u32 %s76, 1
          %s208 = scalar_lea.sflag [#allocation4], %s207
          %s209 = sand.u32 %s76, 1
          %s210 = smul.addr %s209, 8
          %s211 = scalar_lea.vmem [#allocation7], %s210
          %213 = dma.done %s208, 128
        $region48: #{tpu_custom_call.1} parent=43 // pred_fallthru
          _
      $region44: #{tpu_custom_call.1} parent=5 // pred_fallthru
        _
    $region6: #{tpu_custom_call.1} parent=1 // loop_footer
      %s19 = sadd.s32 1, %s15
    $region7: #{tpu_custom_call.1} parent=1 // loop_footer_branch
      %14 = sbr.rel target = $region3
    $region8: #{tpu_custom_call.1} parent=1 // loop_exit
      _
    %214 = vsyncpa [#allocation3], 1
    %s215 = scalar_lea.sflag [#allocation3], 1
    %216 = vsyncpa %s215, 1
    %217 = vsyncpa [#allocation6], 1
    %218 = vsyncpa [#allocation4], 1
    %s219 = scalar_lea.sflag [#allocation4], 1
    %220 = vsyncpa %s219, 1

// kernel: _reglu_apply.1
$region0: #{_reglu_apply.1}
  #allocation0 [shape = 'u32[]', space=smem, size = 0x4, offset = 0x4, fixed_abs, tag = 'smem constant byte address 0x4 - core index']
  #allocation1 [shape = 'u32[72,128]{1,0:T(1,128)}', space=vmem, size = 0x9000, scoped, tag = 'internal scratch']
  %s0 = inlined_call_operand.vmem [shape: f32[16,128], index: 0, kind: input, shape index: {}]
  %s1 = inlined_call_operand.hbm [shape: f32[128,256], index: 1, kind: input, shape index: {}]
  %s2 = inlined_call_operand.vmem [shape: f32[1,256], index: 2, kind: input, shape index: {}]
  %s3 = inlined_call_operand.hbm [shape: f32[128,128], index: 3, kind: input, shape index: {}]
  %s4 = inlined_call_operand.vmem [shape: f32[1,128], index: 4, kind: input, shape index: {}]
  %s5 = inlined_call_operand.vmem [shape: f32[16,128], index: 5, kind: output, shape index: {}]
  %s6 = sld [smem:[#allocation0]]
  $region38: #{_reglu_apply.1} parent=0
    _
  %s8 = ssub.s32 1, %s6
  %s9 = scalar_select 0, %s8, %s6
  $region1: #{_reglu_apply.1} parent=0
    #allocation2 [shape = 'u8[131072]{0}', space=vmem, size = 0x20000, scoped, tag = 'input window, operand 1, single buffered']
    #allocation3 [shape = 's32[1]{0}', space=sflag, size = 0x4, scoped, tag = 'scoped memory for _reglu_apply.1']
    #allocation4 [shape = 'u8[65536]{0}', space=vmem, size = 0x10000, scoped, tag = 'input window, operand 3, single buffered']
    #allocation5 [shape = 's32[1]{0}', space=sflag, size = 0x4, scoped, tag = 'scoped memory for _reglu_apply.1']
    %10 = vsyncpa [#allocation3], 0
    %11 = vsyncpa [#allocation5], 0
    // Predicated region
    $region2: #{_reglu_apply.1} parent=1 // pred_check
      _
    $region3: #{_reglu_apply.1} parent=1 // pred_check_branch
      %13 = sbr.rel (0) target = $region5
    $region4: #{_reglu_apply.1} parent=1 // pred_region
      _
    $region5: #{_reglu_apply.1} parent=1 // pred_fallthru
      _
    // Predicated region
    $region6: #{_reglu_apply.1} parent=1 // pred_check
      _
    $region7: #{_reglu_apply.1} parent=1 // pred_check_branch
      %15 = sbr.rel (0) target = $region9
    $region8: #{_reglu_apply.1} parent=1 // pred_region
      %17 = vsyncadd [#allocation3], 0
      %s18 = sshll.u32 %s1, 4
      %s19 = int_to_ptr.hbm [resolvable:$true] %s18
      %s20 = sshll.u32 [#allocation2], 4
      %s21 = int_to_ptr.vmem [resolvable:$true] %s20
      %26 = dma.hbm_to_vmem [thread:$0]  %s19, 4096, %s21, [#allocation3], 256, 256, 16
    $region9: #{_reglu_apply.1} parent=1 // pred_fallthru
      _
    // Predicated region
    $region10: #{_reglu_apply.1} parent=1 // pred_check
      _
    $region11: #{_reglu_apply.1} parent=1 // pred_check_branch
      %28 = sbr.rel (0) target = $region13
    $region12: #{_reglu_apply.1} parent=1 // pred_region
      _
    $region13: #{_reglu_apply.1} parent=1 // pred_fallthru
      _
    // Predicated region
    $region14: #{_reglu_apply.1} parent=1 // pred_check
      _
    $region15: #{_reglu_apply.1} parent=1 // pred_check_branch
      %30 = sbr.rel (0) target = $region17
    $region16: #{_reglu_apply.1} parent=1 // pred_region
      %32 = vsyncadd [#allocation5], 0
      %s33 = sshll.u32 %s3, 4
      %s34 = int_to_ptr.hbm [resolvable:$true] %s33
      %s35 = sshll.u32 [#allocation4], 4
      %s36 = int_to_ptr.vmem [resolvable:$true] %s35
      %41 = dma.hbm_to_vmem [thread:$0]  %s34, 2048, %s36, [#allocation5], 128, 128, 8
    $region17: #{_reglu_apply.1} parent=1 // pred_fallthru
      _
    // Predicated region
    $region18: #{_reglu_apply.1} parent=1 // pred_check
      _
    $region19: #{_reglu_apply.1} parent=1 // pred_check_branch
      %43 = sbr.rel (0) target = $region21
    $region20: #{_reglu_apply.1} parent=1 // pred_region
      _
    $region21: #{_reglu_apply.1} parent=1 // pred_fallthru
      _
    // Predicated region
    $region22: #{_reglu_apply.1} parent=1 // pred_check
      _
    $region23: #{_reglu_apply.1} parent=1 // pred_check_branch
      %45 = sbr.rel (0) target = $region25
    $region24: #{_reglu_apply.1} parent=1 // pred_region
      %47 = dma.done [#allocation3], 4096
    $region25: #{_reglu_apply.1} parent=1 // pred_fallthru
      _
    // Predicated region
    $region26: #{_reglu_apply.1} parent=1 // pred_check
      _
    $region27: #{_reglu_apply.1} parent=1 // pred_check_branch
      %49 = sbr.rel (0) target = $region29
    $region28: #{_reglu_apply.1} parent=1 // pred_region
      %51 = dma.done [#allocation5], 2048
    $region29: #{_reglu_apply.1} parent=1 // pred_fallthru
      _
    %v52 = vld [vmem:[%s0] sm:$0xff]
    %v53 = vld [vmem:[%s0 + $0x8] sm:$0xff]
    %v54 = vld [vmem:[#allocation2] sm:$0xff]
    %v55 = vld [vmem:[#allocation2 + $0x8] sm:$0xff]
    %v56 = vld [vmem:[#allocation2 + $0x10] sm:$0xff]
    %v57 = vld [vmem:[#allocation2 + $0x18] sm:$0xff]
    %v58 = vld [vmem:[#allocation2 + $0x20] sm:$0xff]
    %v59 = vld [vmem:[#allocation2 + $0x28] sm:$0xff]
    %v60 = vld [vmem:[#allocation2 + $0x30] sm:$0xff]
    %v61 = vld [vmem:[#allocation2 + $0x38] sm:$0xff]
    %v62 = vld [vmem:[#allocation2 + $0x40] sm:$0xff]
    %v63 = vld [vmem:[#allocation2 + $0x48] sm:$0xff]
    %v64 = vld [vmem:[#allocation2 + $0x50] sm:$0xff]
    %v65 = vld [vmem:[#allocation2 + $0x58] sm:$0xff]
    %v66 = vld [vmem:[#allocation2 + $0x60] sm:$0xff]
    %v67 = vld [vmem:[#allocation2 + $0x68] sm:$0xff]
    %v68 = vld [vmem:[#allocation2 + $0x70] sm:$0xff]
    %v69 = vld [vmem:[#allocation2 + $0x78] sm:$0xff]
    %v70 = vld [vmem:[#allocation2 + $0x80] sm:$0xff]
    %v71 = vld [vmem:[#allocation2 + $0x88] sm:$0xff]
    %v72 = vld [vmem:[#allocation2 + $0x90] sm:$0xff]
    %v73 = vld [vmem:[#allocation2 + $0x98] sm:$0xff]
    %v74 = vld [vmem:[#allocation2 + $0xa0] sm:$0xff]
    %v75 = vld [vmem:[#allocation2 + $0xa8] sm:$0xff]
    %v76 = vld [vmem:[#allocation2 + $0xb0] sm:$0xff]
    %v77 = vld [vmem:[#allocation2 + $0xb8] sm:$0xff]
    %v78 = vld [vmem:[#allocation2 + $0xc0] sm:$0xff]
    %v79 = vld [vmem:[#allocation2 + $0xc8] sm:$0xff]
    %v80 = vld [vmem:[#allocation2 + $0xd0] sm:$0xff]
    %v81 = vld [vmem:[#allocation2 + $0xd8] sm:$0xff]
    %v82 = vld [vmem:[#allocation2 + $0xe0] sm:$0xff]
    %v83 = vld [vmem:[#allocation2 + $0xe8] sm:$0xff]
    %v84 = vld [vmem:[#allocation2 + $0xf0] sm:$0xff]
    %v85 = vld [vmem:[#allocation2 + $0xf8] sm:$0xff]
    %v86 = vld [vmem:[%s2] sm:$0x3]
    %v88 = vperm.slane %v86, 0
    %v89 = vperm.slane %v86, 1
    %v92 = vand.u32 %v84, 4294901760
    %93 = vmatpush.msra.mxu0 %v92
    %v94 = vand.u32 %v82, 4294901760
    %95 = vmatpush.msra.mxu0 %v94
    %v96 = vand.u32 %v80, 4294901760
    %97 = vmatpush.msra.mxu0 %v96
    %v98 = vand.u32 %v78, 4294901760
    %99 = vmatpush.msra.mxu0 %v98
    %v100 = vand.u32 %v76, 4294901760
    %101 = vmatpush.msra.mxu0 %v100
    %v102 = vand.u32 %v74, 4294901760
    %103 = vmatpush.msra.mxu0 %v102
    %v104 = vand.u32 %v72, 4294901760
    %105 = vmatpush.msra.mxu0 %v104
    %v106 = vand.u32 %v70, 4294901760
    %107 = vmatpush.msra.mxu0 %v106
    %v108 = vand.u32 %v68, 4294901760
    %109 = vmatpush.msra.mxu0 %v108
    %v110 = vand.u32 %v66, 4294901760
    %111 = vmatpush.msra.mxu0 %v110
    %v112 = vand.u32 %v64, 4294901760
    %113 = vmatpush.msra.mxu0 %v112
    %v114 = vand.u32 %v62, 4294901760
    %115 = vmatpush.msra.mxu0 %v114
    %v116 = vand.u32 %v60, 4294901760
    %117 = vmatpush.msra.mxu0 %v116
    %v118 = vand.u32 %v58, 4294901760
    %119 = vmatpush.msra.mxu0 %v118
    %v120 = vand.u32 %v56, 4294901760
    %121 = vmatpush.msra.mxu0 %v120
    %v122 = vand.u32 %v54, 4294901760
    %123 = vmatpush.msra.mxu0 %v122
    %v124 = vand.u32 %v52, 4294901760
    %v125 = vsub.f32 %v52, %v124
    %v126 = vand.u32 %v125, 4294901760
    %v127 = vsub.f32 %v125, %v126
    %v128 = vand.u32 %v127, 4294901760
    %129 = vmatmul.f32.gmra.mxu0 %v128
    %v130 = vpop.f32.mrf.mxu0
    %v131 = vadd.f32 %v88, %v130
    %v132 = vand.u32 %v53, 4294901760
    %v133 = vsub.f32 %v53, %v132
    %v134 = vand.u32 %v133, 4294901760
    %v135 = vsub.f32 %v133, %v134
    %v136 = vand.u32 %v135, 4294901760
    %137 = vmatmul.f32.gmra.mxu0 %v136
    %v138 = vpop.f32.mrf.mxu0
    %v139 = vadd.f32 %v88, %v138
    %140 = vdwg.mxu0
    %v141 = vand.u32 %v84, 4294901760
    %v142 = vsub.f32 %v84, %v141
    %v143 = vand.u32 %v142, 4294901760
    %v144 = vsub.f32 %v142, %v143
    %v145 = vand.u32 %v144, 4294901760
    %146 = vmatpush.msra.mxu0 %v145
    %v147 = vand.u32 %v82, 4294901760
    %v148 = vsub.f32 %v82, %v147
    %v149 = vand.u32 %v148, 4294901760
    %v150 = vsub.f32 %v148, %v149
    %v151 = vand.u32 %v150, 4294901760
    %152 = vmatpush.msra.mxu0 %v151
    %v153 = vand.u32 %v80, 4294901760
    %v154 = vsub.f32 %v80, %v153
    %v155 = vand.u32 %v154, 4294901760
    %v156 = vsub.f32 %v154, %v155
    %v157 = vand.u32 %v156, 4294901760
    %158 = vmatpush.msra.mxu0 %v157
    %v159 = vand.u32 %v78, 4294901760
    %v160 = vsub.f32 %v78, %v159
    %v161 = vand.u32 %v160, 4294901760
    %v162 = vsub.f32 %v160, %v161
    %v163 = vand.u32 %v162, 4294901760
    %164 = vmatpush.msra.mxu0 %v163
    %v165 = vand.u32 %v76, 4294901760
    %v166 = vsub.f32 %v76, %v165
    %v167 = vand.u32 %v166, 4294901760
    %v168 = vsub.f32 %v166, %v167
    %v169 = vand.u32 %v168, 4294901760
    %170 = vmatpush.msra.mxu0 %v169
    %v171 = vand.u32 %v74, 4294901760
    %v172 = vsub.f32 %v74, %v171
    %v173 = vand.u32 %v172, 4294901760
    %v174 = vsub.f32 %v172, %v173
    %v175 = vand.u32 %v174, 4294901760
    %176 = vmatpush.msra.mxu0 %v175
    %v177 = vand.u32 %v72, 4294901760
    %v178 = vsub.f32 %v72, %v177
    %v179 = vand.u32 %v178, 4294901760
    %v180 = vsub.f32 %v178, %v179
    %v181 = vand.u32 %v180, 4294901760
    %182 = vmatpush.msra.mxu0 %v181
    %v183 = vand.u32 %v70, 4294901760
    %v184 = vsub.f32 %v70, %v183
    %v185 = vand.u32 %v184, 4294901760
    %v186 = vsub.f32 %v184, %v185
    %v187 = vand.u32 %v186, 4294901760
    %188 = vmatpush.msra.mxu0 %v187
    %v189 = vand.u32 %v68, 4294901760
    %v190 = vsub.f32 %v68, %v189
    %v191 = vand.u32 %v190, 4294901760
    %v192 = vsub.f32 %v190, %v191
    %v193 = vand.u32 %v192, 4294901760
    %194 = vmatpush.msra.mxu0 %v193
    %v195 = vand.u32 %v66, 4294901760
    %v196 = vsub.f32 %v66, %v195
    %v197 = vand.u32 %v196, 4294901760
    %v198 = vsub.f32 %v196, %v197
    %v199 = vand.u32 %v198, 4294901760
    %200 = vmatpush.msra.mxu0 %v199
    %v201 = vand.u32 %v64, 4294901760
    %v202 = vsub.f32 %v64, %v201
    %v203 = vand.u32 %v202, 4294901760
    %v204 = vsub.f32 %v202, %v203
    %v205 = vand.u32 %v204, 4294901760
    %206 = vmatpush.msra.mxu0 %v205
    %v207 = vand.u32 %v62, 4294901760
    %v208 = vsub.f32 %v62, %v207
    %v209 = vand.u32 %v208, 4294901760
    %v210 = vsub.f32 %v208, %v209
    %v211 = vand.u32 %v210, 4294901760
    %212 = vmatpush.msra.mxu0 %v211
    %v213 = vand.u32 %v60, 4294901760
    %v214 = vsub.f32 %v60, %v213
    %v215 = vand.u32 %v214, 4294901760
    %v216 = vsub.f32 %v214, %v215
    %v217 = vand.u32 %v216, 4294901760
    %218 = vmatpush.msra.mxu0 %v217
    %v219 = vand.u32 %v58, 4294901760
    %v220 = vsub.f32 %v58, %v219
    %v221 = vand.u32 %v220, 4294901760
    %v222 = vsub.f32 %v220, %v221
    %v223 = vand.u32 %v222, 4294901760
    %224 = vmatpush.msra.mxu0 %v223
    %v225 = vand.u32 %v56, 4294901760
    %v226 = vsub.f32 %v56, %v225
    %v227 = vand.u32 %v226, 4294901760
    %v228 = vsub.f32 %v226, %v227
    %v229 = vand.u32 %v228, 4294901760
    %230 = vmatpush.msra.mxu0 %v229
    %v231 = vand.u32 %v54, 4294901760
    %v232 = vsub.f32 %v54, %v231
    %v233 = vand.u32 %v232, 4294901760
    %v234 = vsub.f32 %v232, %v233
    %v235 = vand.u32 %v234, 4294901760
    %236 = vmatpush.msra.mxu0 %v235
    %v237 = vand.u32 %v52, 4294901760
    %238 = vmatmul.f32.gmra.mxu0 %v237
    %v239 = vpop.f32.mrf.mxu0
    %v240 = vadd.f32 %v131, %v239
    %v241 = vand.u32 %v53, 4294901760
    %242 = vmatmul.f32.gmra.mxu0 %v241
    %v243 = vpop.f32.mrf.mxu0
    %v244 = vadd.f32 %v139, %v243
    %245 = vdwg.mxu0
    %v246 = vand.u32 %v84, 4294901760
    %v247 = vsub.f32 %v84, %v246
    %248 = vmatpush.msra.mxu0 %v247
    %v249 = vand.u32 %v82, 4294901760
    %v250 = vsub.f32 %v82, %v249
    %251 = vmatpush.msra.mxu0 %v250
    %v252 = vand.u32 %v80, 4294901760
    %v253 = vsub.f32 %v80, %v252
    %254 = vmatpush.msra.mxu0 %v253
    %v255 = vand.u32 %v78, 4294901760
    %v256 = vsub.f32 %v78, %v255
    %257 = vmatpush.msra.mxu0 %v256
    %v258 = vand.u32 %v76, 4294901760
    %v259 = vsub.f32 %v76, %v258
    %260 = vmatpush.msra.mxu0 %v259
    %v261 = vand.u32 %v74, 4294901760
    %v262 = vsub.f32 %v74, %v261
    %263 = vmatpush.msra.mxu0 %v262
    %v264 = vand.u32 %v72, 4294901760
    %v265 = vsub.f32 %v72, %v264
    %266 = vmatpush.msra.mxu0 %v265
    %v267 = vand.u32 %v70, 4294901760
    %v268 = vsub.f32 %v70, %v267
    %269 = vmatpush.msra.mxu0 %v268
    %v270 = vand.u32 %v68, 4294901760
    %v271 = vsub.f32 %v68, %v270
    %272 = vmatpush.msra.mxu0 %v271
    %v273 = vand.u32 %v66, 4294901760
    %v274 = vsub.f32 %v66, %v273
    %275 = vmatpush.msra.mxu0 %v274
    %v276 = vand.u32 %v64, 4294901760
    %v277 = vsub.f32 %v64, %v276
    %278 = vmatpush.msra.mxu0 %v277
    %v279 = vand.u32 %v62, 4294901760
    %v280 = vsub.f32 %v62, %v279
    %281 = vmatpush.msra.mxu0 %v280
    %v282 = vand.u32 %v60, 4294901760
    %v283 = vsub.f32 %v60, %v282
    %284 = vmatpush.msra.mxu0 %v283
    %v285 = vand.u32 %v58, 4294901760
    %v286 = vsub.f32 %v58, %v285
    %287 = vmatpush.msra.mxu0 %v286
    %v288 = vand.u32 %v56, 4294901760
    %v289 = vsub.f32 %v56, %v288
    %290 = vmatpush.msra.mxu0 %v289
    %v291 = vand.u32 %v54, 4294901760
    %v292 = vsub.f32 %v54, %v291
    %293 = vmatpush.msra.mxu0 %v292
    %v294 = vand.u32 %v52, 4294901760
    %v295 = vsub.f32 %v52, %v294
    %296 = vmatmul.f32.gmra.mxu0 %v295
    %v297 = vpop.f32.mrf.mxu0
    %v298 = vadd.f32 %v240, %v297
    %v299 = vand.u32 %v53, 4294901760
    %v300 = vsub.f32 %v53, %v299
    %301 = vmatmul.f32.gmra.mxu0 %v300
    %v302 = vpop.f32.mrf.mxu0
    %v303 = vadd.f32 %v244, %v302
    %304 = vdwg.mxu0
    %v305 = vand.u32 %v84, 4294901760
    %306 = vmatpush.msra.mxu0 %v305
    %v307 = vand.u32 %v82, 4294901760
    %308 = vmatpush.msra.mxu0 %v307
    %v309 = vand.u32 %v80, 4294901760
    %310 = vmatpush.msra.mxu0 %v309
    %v311 = vand.u32 %v78, 4294901760
    %312 = vmatpush.msra.mxu0 %v311
    %v313 = vand.u32 %v76, 4294901760
    %314 = vmatpush.msra.mxu0 %v313
    %v315 = vand.u32 %v74, 4294901760
    %316 = vmatpush.msra.mxu0 %v315
    %v317 = vand.u32 %v72, 4294901760
    %318 = vmatpush.msra.mxu0 %v317
    %v319 = vand.u32 %v70, 4294901760
    %320 = vmatpush.msra.mxu0 %v319
    %v321 = vand.u32 %v68, 4294901760
    %322 = vmatpush.msra.mxu0 %v321
    %v323 = vand.u32 %v66, 4294901760
    %324 = vmatpush.msra.mxu0 %v323
    %v325 = vand.u32 %v64, 4294901760
    %326 = vmatpush.msra.mxu0 %v325
    %v327 = vand.u32 %v62, 4294901760
    %328 = vmatpush.msra.mxu0 %v327
    %v329 = vand.u32 %v60, 4294901760
    %330 = vmatpush.msra.mxu0 %v329
    %v331 = vand.u32 %v58, 4294901760
    %332 = vmatpush.msra.mxu0 %v331
    %v333 = vand.u32 %v56, 4294901760
    %334 = vmatpush.msra.mxu0 %v333
    %v335 = vand.u32 %v54, 4294901760
    %336 = vmatpush.msra.mxu0 %v335
    %v337 = vand.u32 %v52, 4294901760
    %v338 = vsub.f32 %v52, %v337
    %v339 = vand.u32 %v338, 4294901760
    %340 = vmatmul.f32.gmra.mxu0 %v339
    %v341 = vpop.f32.mrf.mxu0
    %v342 = vadd.f32 %v298, %v341
    %v343 = vand.u32 %v53, 4294901760
    %v344 = vsub.f32 %v53, %v343
    %v345 = vand.u32 %v344, 4294901760
    %346 = vmatmul.f32.gmra.mxu0 %v345
    %v347 = vpop.f32.mrf.mxu0
    %v348 = vadd.f32 %v303, %v347
    %349 = vdwg.mxu0
    %v350 = vand.u32 %v84, 4294901760
    %v351 = vsub.f32 %v84, %v350
    %v352 = vand.u32 %v351, 4294901760
    %353 = vmatpush.msra.mxu0 %v352
    %v354 = vand.u32 %v82, 4294901760
    %v355 = vsub.f32 %v82, %v354
    %v356 = vand.u32 %v355, 4294901760
    %357 = vmatpush.msra.mxu0 %v356
    %v358 = vand.u32 %v80, 4294901760
    %v359 = vsub.f32 %v80, %v358
    %v360 = vand.u32 %v359, 4294901760
    %361 = vmatpush.msra.mxu0 %v360
    %v362 = vand.u32 %v78, 4294901760
    %v363 = vsub.f32 %v78, %v362
    %v364 = vand.u32 %v363, 4294901760
    %365 = vmatpush.msra.mxu0 %v364
    %v366 = vand.u32 %v76, 4294901760
    %v367 = vsub.f32 %v76, %v366
    %v368 = vand.u32 %v367, 4294901760
    %369 = vmatpush.msra.mxu0 %v368
    %v370 = vand.u32 %v74, 4294901760
    %v371 = vsub.f32 %v74, %v370
    %v372 = vand.u32 %v371, 4294901760
    %373 = vmatpush.msra.mxu0 %v372
    %v374 = vand.u32 %v72, 4294901760
    %v375 = vsub.f32 %v72, %v374
    %v376 = vand.u32 %v375, 4294901760
    %377 = vmatpush.msra.mxu0 %v376
    %v378 = vand.u32 %v70, 4294901760
    %v379 = vsub.f32 %v70, %v378
    %v380 = vand.u32 %v379, 4294901760
    %381 = vmatpush.msra.mxu0 %v380
    %v382 = vand.u32 %v68, 4294901760
    %v383 = vsub.f32 %v68, %v382
    %v384 = vand.u32 %v383, 4294901760
    %385 = vmatpush.msra.mxu0 %v384
    %v386 = vand.u32 %v66, 4294901760
    %v387 = vsub.f32 %v66, %v386
    %v388 = vand.u32 %v387, 4294901760
    %389 = vmatpush.msra.mxu0 %v388
    %v390 = vand.u32 %v64, 4294901760
    %v391 = vsub.f32 %v64, %v390
    %v392 = vand.u32 %v391, 4294901760
    %393 = vmatpush.msra.mxu0 %v392
    %v394 = vand.u32 %v62, 4294901760
    %v395 = vsub.f32 %v62, %v394
    %v396 = vand.u32 %v395, 4294901760
    %397 = vmatpush.msra.mxu0 %v396
    %v398 = vand.u32 %v60, 4294901760
    %v399 = vsub.f32 %v60, %v398
    %v400 = vand.u32 %v399, 4294901760
    %401 = vmatpush.msra.mxu0 %v400
    %v402 = vand.u32 %v58, 4294901760
    %v403 = vsub.f32 %v58, %v402
    %v404 = vand.u32 %v403, 4294901760
    %405 = vmatpush.msra.mxu0 %v404
    %v406 = vand.u32 %v56, 4294901760
    %v407 = vsub.f32 %v56, %v406
    %v408 = vand.u32 %v407, 4294901760
    %409 = vmatpush.msra.mxu0 %v408
    %v410 = vand.u32 %v54, 4294901760
    %v411 = vsub.f32 %v54, %v410
    %v412 = vand.u32 %v411, 4294901760
    %413 = vmatpush.msra.mxu0 %v412
    %v414 = vand.u32 %v52, 4294901760
    %415 = vmatmul.f32.gmra.mxu0 %v414
    %v416 = vpop.f32.mrf.mxu0
    %v417 = vadd.f32 %v342, %v416
    %v418 = vand.u32 %v53, 4294901760
    %419 = vmatmul.f32.gmra.mxu0 %v418
    %v420 = vpop.f32.mrf.mxu0
    %v421 = vadd.f32 %v348, %v420
    %422 = vdwg.mxu0
    %v423 = vand.u32 %v84, 4294901760
    %424 = vmatpush.msra.mxu0 %v423
    %v425 = vand.u32 %v82, 4294901760
    %426 = vmatpush.msra.mxu0 %v425
    %v427 = vand.u32 %v80, 4294901760
    %428 = vmatpush.msra.mxu0 %v427
    %v429 = vand.u32 %v78, 4294901760
    %430 = vmatpush.msra.mxu0 %v429
    %v431 = vand.u32 %v76, 4294901760
    %432 = vmatpush.msra.mxu0 %v431
    %v433 = vand.u32 %v74, 4294901760
    %434 = vmatpush.msra.mxu0 %v433
    %v435 = vand.u32 %v72, 4294901760
    %436 = vmatpush.msra.mxu0 %v435
    %v437 = vand.u32 %v70, 4294901760
    %438 = vmatpush.msra.mxu0 %v437
    %v439 = vand.u32 %v68, 4294901760
    %440 = vmatpush.msra.mxu0 %v439
    %v441 = vand.u32 %v66, 4294901760
    %442 = vmatpush.msra.mxu0 %v441
    %v443 = vand.u32 %v64, 4294901760
    %444 = vmatpush.msra.mxu0 %v443
    %v445 = vand.u32 %v62, 4294901760
    %446 = vmatpush.msra.mxu0 %v445
    %v447 = vand.u32 %v60, 4294901760
    %448 = vmatpush.msra.mxu0 %v447
    %v449 = vand.u32 %v58, 4294901760
    %450 = vmatpush.msra.mxu0 %v449
    %v451 = vand.u32 %v56, 4294901760
    %452 = vmatpush.msra.mxu0 %v451
    %v453 = vand.u32 %v54, 4294901760
    %454 = vmatpush.msra.mxu0 %v453
    %v455 = vand.u32 %v52, 4294901760
    %456 = vmatmul.f32.gmra.mxu0 %v455
    %v457 = vpop.f32.mrf.mxu0
    %v458 = vadd.f32 %v417, %v457
    %v459 = vand.u32 %v53, 4294901760
    %460 = vmatmul.f32.gmra.mxu0 %v459
    %v461 = vpop.f32.mrf.mxu0
    %v462 = vadd.f32 %v421, %v461
    %463 = vdwg.mxu0
    %v464 = vand.u32 %v85, 4294901760
    %465 = vmatpush.msra.mxu0 %v464
    %v466 = vand.u32 %v83, 4294901760
    %467 = vmatpush.msra.mxu0 %v466
    %v468 = vand.u32 %v81, 4294901760
    %469 = vmatpush.msra.mxu0 %v468
    %v470 = vand.u32 %v79, 4294901760
    %471 = vmatpush.msra.mxu0 %v470
    %v472 = vand.u32 %v77, 4294901760
    %473 = vmatpush.msra.mxu0 %v472
    %v474 = vand.u32 %v75, 4294901760
    %475 = vmatpush.msra.mxu0 %v474
    %v476 = vand.u32 %v73, 4294901760
    %477 = vmatpush.msra.mxu0 %v476
    %v478 = vand.u32 %v71, 4294901760
    %479 = vmatpush.msra.mxu0 %v478
    %v480 = vand.u32 %v69, 4294901760
    %481 = vmatpush.msra.mxu0 %v480
    %v482 = vand.u32 %v67, 4294901760
    %483 = vmatpush.msra.mxu0 %v482
    %v484 = vand.u32 %v65, 4294901760
    %485 = vmatpush.msra.mxu0 %v484
    %v486 = vand.u32 %v63, 4294901760
    %487 = vmatpush.msra.mxu0 %v486
    %v488 = vand.u32 %v61, 4294901760
    %489 = vmatpush.msra.mxu0 %v488
    %v490 = vand.u32 %v59, 4294901760
    %491 = vmatpush.msra.mxu0 %v490
    %v492 = vand.u32 %v57, 4294901760
    %493 = vmatpush.msra.mxu0 %v492
    %v494 = vand.u32 %v55, 4294901760
    %495 = vmatpush.msra.mxu0 %v494
    %v496 = vand.u32 %v52, 4294901760
    %v497 = vsub.f32 %v52, %v496
    %v498 = vand.u32 %v497, 4294901760
    %v499 = vsub.f32 %v497, %v498
    %v500 = vand.u32 %v499, 4294901760
    %501 = vmatmul.f32.gmra.mxu0 %v500
    %v502 = vpop.f32.mrf.mxu0
    %v503 = vadd.f32 %v89, %v502
    %v504 = vand.u32 %v53, 4294901760
    %v505 = vsub.f32 %v53, %v504
    %v506 = vand.u32 %v505, 4294901760
    %v507 = vsub.f32 %v505, %v506
    %v508 = vand.u32 %v507, 4294901760
    %509 = vmatmul.f32.gmra.mxu0 %v508
    %v510 = vpop.f32.mrf.mxu0
    %v511 = vadd.f32 %v89, %v510
    %512 = vdwg.mxu0
    %v513 = vand.u32 %v85, 4294901760
    %v514 = vsub.f32 %v85, %v513
    %v515 = vand.u32 %v514, 4294901760
    %v516 = vsub.f32 %v514, %v515
    %v517 = vand.u32 %v516, 4294901760
    %518 = vmatpush.msra.mxu0 %v517
    %v519 = vand.u32 %v83, 4294901760
    %v520 = vsub.f32 %v83, %v519
    %v521 = vand.u32 %v520, 4294901760
    %v522 = vsub.f32 %v520, %v521
    %v523 = vand.u32 %v522, 4294901760
    %524 = vmatpush.msra.mxu0 %v523
    %v525 = vand.u32 %v81, 4294901760
    %v526 = vsub.f32 %v81, %v525
    %v527 = vand.u32 %v526, 4294901760
    %v528 = vsub.f32 %v526, %v527
    %v529 = vand.u32 %v528, 4294901760
    %530 = vmatpush.msra.mxu0 %v529
    %v531 = vand.u32 %v79, 4294901760
    %v532 = vsub.f32 %v79, %v531
    %v533 = vand.u32 %v532, 4294901760
    %v534 = vsub.f32 %v532, %v533
    %v535 = vand.u32 %v534, 4294901760
    %536 = vmatpush.msra.mxu0 %v535
    %v537 = vand.u32 %v77, 4294901760
    %v538 = vsub.f32 %v77, %v537
    %v539 = vand.u32 %v538, 4294901760
    %v540 = vsub.f32 %v538, %v539
    %v541 = vand.u32 %v540, 4294901760
    %542 = vmatpush.msra.mxu0 %v541
    %v543 = vand.u32 %v75, 4294901760
    %v544 = vsub.f32 %v75, %v543
    %v545 = vand.u32 %v544, 4294901760
    %v546 = vsub.f32 %v544, %v545
    %v547 = vand.u32 %v546, 4294901760
    %548 = vmatpush.msra.mxu0 %v547
    %v549 = vand.u32 %v73, 4294901760
    %v550 = vsub.f32 %v73, %v549
    %v551 = vand.u32 %v550, 4294901760
    %v552 = vsub.f32 %v550, %v551
    %v553 = vand.u32 %v552, 4294901760
    %554 = vmatpush.msra.mxu0 %v553
    %v555 = vand.u32 %v71, 4294901760
    %v556 = vsub.f32 %v71, %v555
    %v557 = vand.u32 %v556, 4294901760
    %v558 = vsub.f32 %v556, %v557
    %v559 = vand.u32 %v558, 4294901760
    %560 = vmatpush.msra.mxu0 %v559
    %v561 = vand.u32 %v69, 4294901760
    %v562 = vsub.f32 %v69, %v561
    %v563 = vand.u32 %v562, 4294901760
    %v564 = vsub.f32 %v562, %v563
    %v565 = vand.u32 %v564, 4294901760
    %566 = vmatpush.msra.mxu0 %v565
    %v567 = vand.u32 %v67, 4294901760
    %v568 = vsub.f32 %v67, %v567
    %v569 = vand.u32 %v568, 4294901760
    %v570 = vsub.f32 %v568, %v569
    %v571 = vand.u32 %v570, 4294901760
    %572 = vmatpush.msra.mxu0 %v571
    %v573 = vand.u32 %v65, 4294901760
    %v574 = vsub.f32 %v65, %v573
    %v575 = vand.u32 %v574, 4294901760
    %v576 = vsub.f32 %v574, %v575
    %v577 = vand.u32 %v576, 4294901760
    %578 = vmatpush.msra.mxu0 %v577
    %v579 = vand.u32 %v63, 4294901760
    %v580 = vsub.f32 %v63, %v579
    %v581 = vand.u32 %v580, 4294901760
    %v582 = vsub.f32 %v580, %v581
    %v583 = vand.u32 %v582, 4294901760
    %584 = vmatpush.msra.mxu0 %v583
    %v585 = vand.u32 %v61, 4294901760
    %v586 = vsub.f32 %v61, %v585
    %v587 = vand.u32 %v586, 4294901760
    %v588 = vsub.f32 %v586, %v587
    %v589 = vand.u32 %v588, 4294901760
    %590 = vmatpush.msra.mxu0 %v589
    %v591 = vand.u32 %v59, 4294901760
    %v592 = vsub.f32 %v59, %v591
    %v593 = vand.u32 %v592, 4294901760
    %v594 = vsub.f32 %v592, %v593
    %v595 = vand.u32 %v594, 4294901760
    %596 = vmatpush.msra.mxu0 %v595
    %v597 = vand.u32 %v57, 4294901760
    %v598 = vsub.f32 %v57, %v597
    %v599 = vand.u32 %v598, 4294901760
    %v600 = vsub.f32 %v598, %v599
    %v601 = vand.u32 %v600, 4294901760
    %602 = vmatpush.msra.mxu0 %v601
    %v603 = vand.u32 %v55, 4294901760
    %v604 = vsub.f32 %v55, %v603
    %v605 = vand.u32 %v604, 4294901760
    %v606 = vsub.f32 %v604, %v605
    %v607 = vand.u32 %v606, 4294901760
    %608 = vmatpush.msra.mxu0 %v607
    %v609 = vand.u32 %v52, 4294901760
    %610 = vmatmul.f32.gmra.mxu0 %v609
    %v611 = vpop.f32.mrf.mxu0
    %v612 = vadd.f32 %v503, %v611
    %v613 = vand.u32 %v53, 4294901760
    %614 = vmatmul.f32.gmra.mxu0 %v613
    %v615 = vpop.f32.mrf.mxu0
    %v616 = vadd.f32 %v511, %v615
    %617 = vdwg.mxu0
    %v618 = vand.u32 %v85, 4294901760
    %v619 = vsub.f32 %v85, %v618
    %620 = vmatpush.msra.mxu0 %v619
    %v621 = vand.u32 %v83, 4294901760
    %v622 = vsub.f32 %v83, %v621
    %623 = vmatpush.msra.mxu0 %v622
    %v624 = vand.u32 %v81, 4294901760
    %v625 = vsub.f32 %v81, %v624
    %626 = vmatpush.msra.mxu0 %v625
    %v627 = vand.u32 %v79, 4294901760
    %v628 = vsub.f32 %v79, %v627
    %629 = vmatpush.msra.mxu0 %v628
    %v630 = vand.u32 %v77, 4294901760
    %v631 = vsub.f32 %v77, %v630
    %632 = vmatpush.msra.mxu0 %v631
    %v633 = vand.u32 %v75, 4294901760
    %v634 = vsub.f32 %v75, %v633
    %635 = vmatpush.msra.mxu0 %v634
    %v636 = vand.u32 %v73, 4294901760
    %v637 = vsub.f32 %v73, %v636
    %638 = vmatpush.msra.mxu0 %v637
    %v639 = vand.u32 %v71, 4294901760
    %v640 = vsub.f32 %v71, %v639
    %641 = vmatpush.msra.mxu0 %v640
    %v642 = vand.u32 %v69, 4294901760
    %v643 = vsub.f32 %v69, %v642
    %644 = vmatpush.msra.mxu0 %v643
    %v645 = vand.u32 %v67, 4294901760
    %v646 = vsub.f32 %v67, %v645
    %647 = vmatpush.msra.mxu0 %v646
    %v648 = vand.u32 %v65, 4294901760
    %v649 = vsub.f32 %v65, %v648
    %650 = vmatpush.msra.mxu0 %v649
    %v651 = vand.u32 %v63, 4294901760
    %v652 = vsub.f32 %v63, %v651
    %653 = vmatpush.msra.mxu0 %v652
    %v654 = vand.u32 %v61, 4294901760
    %v655 = vsub.f32 %v61, %v654
    %656 = vmatpush.msra.mxu0 %v655
    %v657 = vand.u32 %v59, 4294901760
    %v658 = vsub.f32 %v59, %v657
    %659 = vmatpush.msra.mxu0 %v658
    %v660 = vand.u32 %v57, 4294901760
    %v661 = vsub.f32 %v57, %v660
    %662 = vmatpush.msra.mxu0 %v661
    %v663 = vand.u32 %v55, 4294901760
    %v664 = vsub.f32 %v55, %v663
    %665 = vmatpush.msra.mxu0 %v664
    %v666 = vand.u32 %v52, 4294901760
    %v667 = vsub.f32 %v52, %v666
    %668 = vmatmul.f32.gmra.mxu0 %v667
    %v669 = vpop.f32.mrf.mxu0
    %v670 = vadd.f32 %v612, %v669
    %v671 = vand.u32 %v53, 4294901760
    %v672 = vsub.f32 %v53, %v671
    %673 = vmatmul.f32.gmra.mxu0 %v672
    %v674 = vpop.f32.mrf.mxu0
    %v675 = vadd.f32 %v616, %v674
    %676 = vdwg.mxu0
    %v677 = vand.u32 %v85, 4294901760
    %678 = vmatpush.msra.mxu0 %v677
    %v679 = vand.u32 %v83, 4294901760
    %680 = vmatpush.msra.mxu0 %v679
    %v681 = vand.u32 %v81, 4294901760
    %682 = vmatpush.msra.mxu0 %v681
    %v683 = vand.u32 %v79, 4294901760
    %684 = vmatpush.msra.mxu0 %v683
    %v685 = vand.u32 %v77, 4294901760
    %686 = vmatpush.msra.mxu0 %v685
    %v687 = vand.u32 %v75, 4294901760
    %688 = vmatpush.msra.mxu0 %v687
    %v689 = vand.u32 %v73, 4294901760
    %690 = vmatpush.msra.mxu0 %v689
    %v691 = vand.u32 %v71, 4294901760
    %692 = vmatpush.msra.mxu0 %v691
    %v693 = vand.u32 %v69, 4294901760
    %694 = vmatpush.msra.mxu0 %v693
    %v695 = vand.u32 %v67, 4294901760
    %696 = vmatpush.msra.mxu0 %v695
    %v697 = vand.u32 %v65, 4294901760
    %698 = vmatpush.msra.mxu0 %v697
    %v699 = vand.u32 %v63, 4294901760
    %700 = vmatpush.msra.mxu0 %v699
    %v701 = vand.u32 %v61, 4294901760
    %702 = vmatpush.msra.mxu0 %v701
    %v703 = vand.u32 %v59, 4294901760
    %704 = vmatpush.msra.mxu0 %v703
    %v705 = vand.u32 %v57, 4294901760
    %706 = vmatpush.msra.mxu0 %v705
    %v707 = vand.u32 %v55, 4294901760
    %708 = vmatpush.msra.mxu0 %v707
    %v709 = vand.u32 %v52, 4294901760
    %v710 = vsub.f32 %v52, %v709
    %v711 = vand.u32 %v710, 4294901760
    %712 = vmatmul.f32.gmra.mxu0 %v711
    %v713 = vpop.f32.mrf.mxu0
    %v714 = vadd.f32 %v670, %v713
    %v715 = vand.u32 %v53, 4294901760
    %v716 = vsub.f32 %v53, %v715
    %v717 = vand.u32 %v716, 4294901760
    %718 = vmatmul.f32.gmra.mxu0 %v717
    %v719 = vpop.f32.mrf.mxu0
    %v720 = vadd.f32 %v675, %v719
    %721 = vdwg.mxu0
    %v722 = vand.u32 %v85, 4294901760
    %v723 = vsub.f32 %v85, %v722
    %v724 = vand.u32 %v723, 4294901760
    %725 = vmatpush.msra.mxu0 %v724
    %v726 = vand.u32 %v83, 4294901760
    %v727 = vsub.f32 %v83, %v726
    %v728 = vand.u32 %v727, 4294901760
    %729 = vmatpush.msra.mxu0 %v728
    %v730 = vand.u32 %v81, 4294901760
    %v731 = vsub.f32 %v81, %v730
    %v732 = vand.u32 %v731, 4294901760
    %733 = vmatpush.msra.mxu0 %v732
    %v734 = vand.u32 %v79, 4294901760
    %v735 = vsub.f32 %v79, %v734
    %v736 = vand.u32 %v735, 4294901760
    %737 = vmatpush.msra.mxu0 %v736
    %v738 = vand.u32 %v77, 4294901760
    %v739 = vsub.f32 %v77, %v738
    %v740 = vand.u32 %v739, 4294901760
    %741 = vmatpush.msra.mxu0 %v740
    %v742 = vand.u32 %v75, 4294901760
    %v743 = vsub.f32 %v75, %v742
    %v744 = vand.u32 %v743, 4294901760
    %745 = vmatpush.msra.mxu0 %v744
    %v746 = vand.u32 %v73, 4294901760
    %v747 = vsub.f32 %v73, %v746
    %v748 = vand.u32 %v747, 4294901760
    %749 = vmatpush.msra.mxu0 %v748
    %v750 = vand.u32 %v71, 4294901760
    %v751 = vsub.f32 %v71, %v750
    %v752 = vand.u32 %v751, 4294901760
    %753 = vmatpush.msra.mxu0 %v752
    %v754 = vand.u32 %v69, 4294901760
    %v755 = vsub.f32 %v69, %v754
    %v756 = vand.u32 %v755, 4294901760
    %757 = vmatpush.msra.mxu0 %v756
    %v758 = vand.u32 %v67, 4294901760
    %v759 = vsub.f32 %v67, %v758
    %v760 = vand.u32 %v759, 4294901760
    %761 = vmatpush.msra.mxu0 %v760
    %v762 = vand.u32 %v65, 4294901760
    %v763 = vsub.f32 %v65, %v762
    %v764 = vand.u32 %v763, 4294901760
    %765 = vmatpush.msra.mxu0 %v764
    %v766 = vand.u32 %v63, 4294901760
    %v767 = vsub.f32 %v63, %v766
    %v768 = vand.u32 %v767, 4294901760
    %769 = vmatpush.msra.mxu0 %v768
    %v770 = vand.u32 %v61, 4294901760
    %v771 = vsub.f32 %v61, %v770
    %v772 = vand.u32 %v771, 4294901760
    %773 = vmatpush.msra.mxu0 %v772
    %v774 = vand.u32 %v59, 4294901760
    %v775 = vsub.f32 %v59, %v774
    %v776 = vand.u32 %v775, 4294901760
    %777 = vmatpush.msra.mxu0 %v776
    %v778 = vand.u32 %v57, 4294901760
    %v779 = vsub.f32 %v57, %v778
    %v780 = vand.u32 %v779, 4294901760
    %781 = vmatpush.msra.mxu0 %v780
    %v782 = vand.u32 %v55, 4294901760
    %v783 = vsub.f32 %v55, %v782
    %v784 = vand.u32 %v783, 4294901760
    %785 = vmatpush.msra.mxu0 %v784
    %v786 = vand.u32 %v52, 4294901760
    %787 = vmatmul.f32.gmra.mxu0 %v786
    %v788 = vpop.f32.mrf.mxu0
    %v789 = vadd.f32 %v714, %v788
    %v790 = vand.u32 %v53, 4294901760
    %791 = vmatmul.f32.gmra.mxu0 %v790
    %v792 = vpop.f32.mrf.mxu0
    %v793 = vadd.f32 %v720, %v792
    %794 = vdwg.mxu0
    %v795 = vand.u32 %v85, 4294901760
    %796 = vmatpush.msra.mxu0 %v795
    %v797 = vand.u32 %v83, 4294901760
    %798 = vmatpush.msra.mxu0 %v797
    %v799 = vand.u32 %v81, 4294901760
    %800 = vmatpush.msra.mxu0 %v799
    %v801 = vand.u32 %v79, 4294901760
    %802 = vmatpush.msra.mxu0 %v801
    %v803 = vand.u32 %v77, 4294901760
    %804 = vmatpush.msra.mxu0 %v803
    %v805 = vand.u32 %v75, 4294901760
    %806 = vmatpush.msra.mxu0 %v805
    %v807 = vand.u32 %v73, 4294901760
    %808 = vmatpush.msra.mxu0 %v807
    %v809 = vand.u32 %v71, 4294901760
    %810 = vmatpush.msra.mxu0 %v809
    %v811 = vand.u32 %v69, 4294901760
    %812 = vmatpush.msra.mxu0 %v811
    %v813 = vand.u32 %v67, 4294901760
    %814 = vmatpush.msra.mxu0 %v813
    %v815 = vand.u32 %v65, 4294901760
    %816 = vmatpush.msra.mxu0 %v815
    %v817 = vand.u32 %v63, 4294901760
    %818 = vmatpush.msra.mxu0 %v817
    %v819 = vand.u32 %v61, 4294901760
    %820 = vmatpush.msra.mxu0 %v819
    %v821 = vand.u32 %v59, 4294901760
    %822 = vmatpush.msra.mxu0 %v821
    %v823 = vand.u32 %v57, 4294901760
    %824 = vmatpush.msra.mxu0 %v823
    %v825 = vand.u32 %v55, 4294901760
    %826 = vmatpush.msra.mxu0 %v825
    %v827 = vand.u32 %v52, 4294901760
    %828 = vmatmul.f32.gmra.mxu0 %v827
    %v829 = vpop.f32.mrf.mxu0
    %v830 = vadd.f32 %v789, %v829
    %v831 = vand.u32 %v53, 4294901760
    %832 = vmatmul.f32.gmra.mxu0 %v831
    %v833 = vpop.f32.mrf.mxu0
    %v834 = vadd.f32 %v793, %v833
    %835 = vdwg.mxu0
    %v836 = vmax.f32 %v458, 0.0
    %v837 = vmax.f32 %v462, 0.0
    %v838 = vmul.f32 %v836, %v830
    %v839 = vmul.f32 %v837, %v834
    %v840 = vld [vmem:[#allocation4] sm:$0xff]
    %v841 = vld [vmem:[#allocation4 + $0x8] sm:$0xff]
    %v842 = vld [vmem:[#allocation4 + $0x10] sm:$0xff]
    %v843 = vld [vmem:[#allocation4 + $0x18] sm:$0xff]
    %v844 = vld [vmem:[#allocation4 + $0x20] sm:$0xff]
    %v845 = vld [vmem:[#allocation4 + $0x28] sm:$0xff]
    %v846 = vld [vmem:[#allocation4 + $0x30] sm:$0xff]
    %v847 = vld [vmem:[#allocation4 + $0x38] sm:$0xff]
    %v848 = vld [vmem:[#allocation4 + $0x40] sm:$0xff]
    %v849 = vld [vmem:[#allocation4 + $0x48] sm:$0xff]
    %v850 = vld [vmem:[#allocation4 + $0x50] sm:$0xff]
    %v851 = vld [vmem:[#allocation4 + $0x58] sm:$0xff]
    %v852 = vld [vmem:[#allocation4 + $0x60] sm:$0xff]
    %v853 = vld [vmem:[#allocation4 + $0x68] sm:$0xff]
    %v854 = vld [vmem:[#allocation4 + $0x70] sm:$0xff]
    %v855 = vld [vmem:[#allocation4 + $0x78] sm:$0xff]
    %v856 = vld [vmem:[%s4] sm:$0x1]
    %v858 = vperm.slane %v856, 0
    %v860 = vand.u32 %v855, 4294901760
    %861 = vmatpush.msra.mxu0 %v860
    %v862 = vand.u32 %v854, 4294901760
    %863 = vmatpush.msra.mxu0 %v862
    %v864 = vand.u32 %v853, 4294901760
    %865 = vmatpush.msra.mxu0 %v864
    %v866 = vand.u32 %v852, 4294901760
    %867 = vmatpush.msra.mxu0 %v866
    %v868 = vand.u32 %v851, 4294901760
    %869 = vmatpush.msra.mxu0 %v868
    %v870 = vand.u32 %v850, 4294901760
    %871 = vmatpush.msra.mxu0 %v870
    %v872 = vand.u32 %v849, 4294901760
    %873 = vmatpush.msra.mxu0 %v872
    %v874 = vand.u32 %v848, 4294901760
    %875 = vmatpush.msra.mxu0 %v874
    %v876 = vand.u32 %v847, 4294901760
    %877 = vmatpush.msra.mxu0 %v876
    %v878 = vand.u32 %v846, 4294901760
    %879 = vmatpush.msra.mxu0 %v878
    %v880 = vand.u32 %v845, 4294901760
    %881 = vmatpush.msra.mxu0 %v880
    %v882 = vand.u32 %v844, 4294901760
    %883 = vmatpush.msra.mxu0 %v882
    %v884 = vand.u32 %v843, 4294901760
    %885 = vmatpush.msra.mxu0 %v884
    %v886 = vand.u32 %v842, 4294901760
    %887 = vmatpush.msra.mxu0 %v886
    %v888 = vand.u32 %v841, 4294901760
    %889 = vmatpush.msra.mxu0 %v888
    %v890 = vand.u32 %v840, 4294901760
    %891 = vmatpush.msra.mxu0 %v890
    %v892 = vand.u32 %v838, 4294901760
    %v893 = vsub.f32 %v838, %v892
    %v894 = vand.u32 %v893, 4294901760
    %v895 = vsub.f32 %v893, %v894
    %v896 = vand.u32 %v895, 4294901760
    %897 = vmatmul.f32.gmra.mxu0 %v896
    %v898 = vpop.f32.mrf.mxu0
    %v899 = vadd.f32 %v858, %v898
    %v900 = vand.u32 %v839, 4294901760
    %v901 = vsub.f32 %v839, %v900
    %v902 = vand.u32 %v901, 4294901760
    %v903 = vsub.f32 %v901, %v902
    %v904 = vand.u32 %v903, 4294901760
    %905 = vmatmul.f32.gmra.mxu0 %v904
    %v906 = vpop.f32.mrf.mxu0
    %v907 = vadd.f32 %v858, %v906
    %908 = vdwg.mxu0
    %v909 = vand.u32 %v855, 4294901760
    %v910 = vsub.f32 %v855, %v909
    %v911 = vand.u32 %v910, 4294901760
    %v912 = vsub.f32 %v910, %v911
    %v913 = vand.u32 %v912, 4294901760
    %914 = vmatpush.msra.mxu0 %v913
    %v915 = vand.u32 %v854, 4294901760
    %v916 = vsub.f32 %v854, %v915
    %v917 = vand.u32 %v916, 4294901760
    %v918 = vsub.f32 %v916, %v917
    %v919 = vand.u32 %v918, 4294901760
    %920 = vmatpush.msra.mxu0 %v919
    %v921 = vand.u32 %v853, 4294901760
    %v922 = vsub.f32 %v853, %v921
    %v923 = vand.u32 %v922, 4294901760
    %v924 = vsub.f32 %v922, %v923
    %v925 = vand.u32 %v924, 4294901760
    %926 = vmatpush.msra.mxu0 %v925
    %v927 = vand.u32 %v852, 4294901760
    %v928 = vsub.f32 %v852, %v927
    %v929 = vand.u32 %v928, 4294901760
    %v930 = vsub.f32 %v928, %v929
    %v931 = vand.u32 %v930, 4294901760
    %932 = vmatpush.msra.mxu0 %v931
    %v933 = vand.u32 %v851, 4294901760
    %v934 = vsub.f32 %v851, %v933
    %v935 = vand.u32 %v934, 4294901760
    %v936 = vsub.f32 %v934, %v935
    %v937 = vand.u32 %v936, 4294901760
    %938 = vmatpush.msra.mxu0 %v937
    %v939 = vand.u32 %v850, 4294901760
    %v940 = vsub.f32 %v850, %v939
    %v941 = vand.u32 %v940, 4294901760
    %v942 = vsub.f32 %v940, %v941
    %v943 = vand.u32 %v942, 4294901760
    %944 = vmatpush.msra.mxu0 %v943
    %v945 = vand.u32 %v849, 4294901760
    %v946 = vsub.f32 %v849, %v945
    %v947 = vand.u32 %v946, 4294901760
    %v948 = vsub.f32 %v946, %v947
    %v949 = vand.u32 %v948, 4294901760
    %950 = vmatpush.msra.mxu0 %v949
    %v951 = vand.u32 %v848, 4294901760
    %v952 = vsub.f32 %v848, %v951
    %v953 = vand.u32 %v952, 4294901760
    %v954 = vsub.f32 %v952, %v953
    %v955 = vand.u32 %v954, 4294901760
    %956 = vmatpush.msra.mxu0 %v955
    %v957 = vand.u32 %v847, 4294901760
    %v958 = vsub.f32 %v847, %v957
    %v959 = vand.u32 %v958, 4294901760
    %v960 = vsub.f32 %v958, %v959
    %v961 = vand.u32 %v960, 4294901760
    %962 = vmatpush.msra.mxu0 %v961
    %v963 = vand.u32 %v846, 4294901760
    %v964 = vsub.f32 %v846, %v963
    %v965 = vand.u32 %v964, 4294901760
    %v966 = vsub.f32 %v964, %v965
    %v967 = vand.u32 %v966, 4294901760
    %968 = vmatpush.msra.mxu0 %v967
    %v969 = vand.u32 %v845, 4294901760
    %v970 = vsub.f32 %v845, %v969
    %v971 = vand.u32 %v970, 4294901760
    %v972 = vsub.f32 %v970, %v971
    %v973 = vand.u32 %v972, 4294901760
    %974 = vmatpush.msra.mxu0 %v973
    %v975 = vand.u32 %v844, 4294901760
    %v976 = vsub.f32 %v844, %v975
    %v977 = vand.u32 %v976, 4294901760
    %v978 = vsub.f32 %v976, %v977
    %v979 = vand.u32 %v978, 4294901760
    %980 = vmatpush.msra.mxu0 %v979
    %v981 = vand.u32 %v843, 4294901760
    %v982 = vsub.f32 %v843, %v981
    %v983 = vand.u32 %v982, 4294901760
    %v984 = vsub.f32 %v982, %v983
    %v985 = vand.u32 %v984, 4294901760
    %986 = vmatpush.msra.mxu0 %v985
    %v987 = vand.u32 %v842, 4294901760
    %v988 = vsub.f32 %v842, %v987
    %v989 = vand.u32 %v988, 4294901760
    %v990 = vsub.f32 %v988, %v989
    %v991 = vand.u32 %v990, 4294901760
    %992 = vmatpush.msra.mxu0 %v991
    %v993 = vand.u32 %v841, 4294901760
    %v994 = vsub.f32 %v841, %v993
    %v995 = vand.u32 %v994, 4294901760
    %v996 = vsub.f32 %v994, %v995
    %v997 = vand.u32 %v996, 4294901760
    %998 = vmatpush.msra.mxu0 %v997
    %v999 = vand.u32 %v840, 4294901760
    %v1000 = vsub.f32 %v840, %v999
    %v1001 = vand.u32 %v1000, 4294901760
    %v1002 = vsub.f32 %v1000, %v1001
    %v1003 = vand.u32 %v1002, 4294901760
    %1004 = vmatpush.msra.mxu0 %v1003
    %v1005 = vand.u32 %v838, 4294901760
    %1006 = vmatmul.f32.gmra.mxu0 %v1005
    %v1007 = vpop.f32.mrf.mxu0
    %v1008 = vadd.f32 %v899, %v1007
    %v1009 = vand.u32 %v839, 4294901760
    %1010 = vmatmul.f32.gmra.mxu0 %v1009
    %v1011 = vpop.f32.mrf.mxu0
    %v1012 = vadd.f32 %v907, %v1011
    %1013 = vdwg.mxu0
    %v1014 = vand.u32 %v855, 4294901760
    %v1015 = vsub.f32 %v855, %v1014
    %1016 = vmatpush.msra.mxu0 %v1015
    %v1017 = vand.u32 %v854, 4294901760
    %v1018 = vsub.f32 %v854, %v1017
    %1019 = vmatpush.msra.mxu0 %v1018
    %v1020 = vand.u32 %v853, 4294901760
    %v1021 = vsub.f32 %v853, %v1020
    %1022 = vmatpush.msra.mxu0 %v1021
    %v1023 = vand.u32 %v852, 4294901760
    %v1024 = vsub.f32 %v852, %v1023
    %1025 = vmatpush.msra.mxu0 %v1024
    %v1026 = vand.u32 %v851, 4294901760
    %v1027 = vsub.f32 %v851, %v1026
    %1028 = vmatpush.msra.mxu0 %v1027
    %v1029 = vand.u32 %v850, 4294901760
    %v1030 = vsub.f32 %v850, %v1029
    %1031 = vmatpush.msra.mxu0 %v1030
    %v1032 = vand.u32 %v849, 4294901760
    %v1033 = vsub.f32 %v849, %v1032
    %1034 = vmatpush.msra.mxu0 %v1033
    %v1035 = vand.u32 %v848, 4294901760
    %v1036 = vsub.f32 %v848, %v1035
    %1037 = vmatpush.msra.mxu0 %v1036
    %v1038 = vand.u32 %v847, 4294901760
    %v1039 = vsub.f32 %v847, %v1038
    %1040 = vmatpush.msra.mxu0 %v1039
    %v1041 = vand.u32 %v846, 4294901760
    %v1042 = vsub.f32 %v846, %v1041
    %1043 = vmatpush.msra.mxu0 %v1042
    %v1044 = vand.u32 %v845, 4294901760
    %v1045 = vsub.f32 %v845, %v1044
    %1046 = vmatpush.msra.mxu0 %v1045
    %v1047 = vand.u32 %v844, 4294901760
    %v1048 = vsub.f32 %v844, %v1047
    %1049 = vmatpush.msra.mxu0 %v1048
    %v1050 = vand.u32 %v843, 4294901760
    %v1051 = vsub.f32 %v843, %v1050
    %1052 = vmatpush.msra.mxu0 %v1051
    %v1053 = vand.u32 %v842, 4294901760
    %v1054 = vsub.f32 %v842, %v1053
    %1055 = vmatpush.msra.mxu0 %v1054
    %v1056 = vand.u32 %v841, 4294901760
    %v1057 = vsub.f32 %v841, %v1056
    %1058 = vmatpush.msra.mxu0 %v1057
    %v1059 = vand.u32 %v840, 4294901760
    %v1060 = vsub.f32 %v840, %v1059
    %1061 = vmatpush.msra.mxu0 %v1060
    %v1062 = vand.u32 %v838, 4294901760
    %v1063 = vsub.f32 %v838, %v1062
    %1064 = vmatmul.f32.gmra.mxu0 %v1063
    %v1065 = vpop.f32.mrf.mxu0
    %v1066 = vadd.f32 %v1008, %v1065
    %v1067 = vand.u32 %v839, 4294901760
    %v1068 = vsub.f32 %v839, %v1067
    %1069 = vmatmul.f32.gmra.mxu0 %v1068
    %v1070 = vpop.f32.mrf.mxu0
    %v1071 = vadd.f32 %v1012, %v1070
    %1072 = vdwg.mxu0
    %v1073 = vand.u32 %v855, 4294901760
    %1074 = vmatpush.msra.mxu0 %v1073
    %v1075 = vand.u32 %v854, 4294901760
    %1076 = vmatpush.msra.mxu0 %v1075
    %v1077 = vand.u32 %v853, 4294901760
    %1078 = vmatpush.msra.mxu0 %v1077
    %v1079 = vand.u32 %v852, 4294901760
    %1080 = vmatpush.msra.mxu0 %v1079
    %v1081 = vand.u32 %v851, 4294901760
    %1082 = vmatpush.msra.mxu0 %v1081
    %v1083 = vand.u32 %v850, 4294901760
    %1084 = vmatpush.msra.mxu0 %v1083
    %v1085 = vand.u32 %v849, 4294901760
    %1086 = vmatpush.msra.mxu0 %v1085
    %v1087 = vand.u32 %v848, 4294901760
    %1088 = vmatpush.msra.mxu0 %v1087
    %v1089 = vand.u32 %v847, 4294901760
    %1090 = vmatpush.msra.mxu0 %v1089
    %v1091 = vand.u32 %v846, 4294901760
    %1092 = vmatpush.msra.mxu0 %v1091
    %v1093 = vand.u32 %v845, 4294901760
    %1094 = vmatpush.msra.mxu0 %v1093
    %v1095 = vand.u32 %v844, 4294901760
    %1096 = vmatpush.msra.mxu0 %v1095
    %v1097 = vand.u32 %v843, 4294901760
    %1098 = vmatpush.msra.mxu0 %v1097
    %v1099 = vand.u32 %v842, 4294901760
    %1100 = vmatpush.msra.mxu0 %v1099
    %v1101 = vand.u32 %v841, 4294901760
    %1102 = vmatpush.msra.mxu0 %v1101
    %v1103 = vand.u32 %v840, 4294901760
    %1104 = vmatpush.msra.mxu0 %v1103
    %v1105 = vand.u32 %v838, 4294901760
    %v1106 = vsub.f32 %v838, %v1105
    %v1107 = vand.u32 %v1106, 4294901760
    %1108 = vmatmul.f32.gmra.mxu0 %v1107
    %v1109 = vpop.f32.mrf.mxu0
    %v1110 = vadd.f32 %v1066, %v1109
    %v1111 = vand.u32 %v839, 4294901760
    %v1112 = vsub.f32 %v839, %v1111
    %v1113 = vand.u32 %v1112, 4294901760
    %1114 = vmatmul.f32.gmra.mxu0 %v1113
    %v1115 = vpop.f32.mrf.mxu0
    %v1116 = vadd.f32 %v1071, %v1115
    %1117 = vdwg.mxu0
    %v1118 = vand.u32 %v855, 4294901760
    %v1119 = vsub.f32 %v855, %v1118
    %v1120 = vand.u32 %v1119, 4294901760
    %1121 = vmatpush.msra.mxu0 %v1120
    %v1122 = vand.u32 %v854, 4294901760
    %v1123 = vsub.f32 %v854, %v1122
    %v1124 = vand.u32 %v1123, 4294901760
    %1125 = vmatpush.msra.mxu0 %v1124
    %v1126 = vand.u32 %v853, 4294901760
    %v1127 = vsub.f32 %v853, %v1126
    %v1128 = vand.u32 %v1127, 4294901760
    %1129 = vmatpush.msra.mxu0 %v1128
    %v1130 = vand.u32 %v852, 4294901760
    %v1131 = vsub.f32 %v852, %v1130
    %v1132 = vand.u32 %v1131, 4294901760
    %1133 = vmatpush.msra.mxu0 %v1132
    %v1134 = vand.u32 %v851, 4294901760
    %v1135 = vsub.f32 %v851, %v1134
    %v1136 = vand.u32 %v1135, 4294901760
    %1137 = vmatpush.msra.mxu0 %v1136
    %v1138 = vand.u32 %v850, 4294901760
    %v1139 = vsub.f32 %v850, %v1138
    %v1140 = vand.u32 %v1139, 4294901760
    %1141 = vmatpush.msra.mxu0 %v1140
    %v1142 = vand.u32 %v849, 4294901760
    %v1143 = vsub.f32 %v849, %v1142
    %v1144 = vand.u32 %v1143, 4294901760
    %1145 = vmatpush.msra.mxu0 %v1144
    %v1146 = vand.u32 %v848, 4294901760
    %v1147 = vsub.f32 %v848, %v1146
    %v1148 = vand.u32 %v1147, 4294901760
    %1149 = vmatpush.msra.mxu0 %v1148
    %v1150 = vand.u32 %v847, 4294901760
    %v1151 = vsub.f32 %v847, %v1150
    %v1152 = vand.u32 %v1151, 4294901760
    %1153 = vmatpush.msra.mxu0 %v1152
    %v1154 = vand.u32 %v846, 4294901760
    %v1155 = vsub.f32 %v846, %v1154
    %v1156 = vand.u32 %v1155, 4294901760
    %1157 = vmatpush.msra.mxu0 %v1156
    %v1158 = vand.u32 %v845, 4294901760
    %v1159 = vsub.f32 %v845, %v1158
    %v1160 = vand.u32 %v1159, 4294901760
    %1161 = vmatpush.msra.mxu0 %v1160
    %v1162 = vand.u32 %v844, 4294901760
    %v1163 = vsub.f32 %v844, %v1162
    %v1164 = vand.u32 %v1163, 4294901760
    %1165 = vmatpush.msra.mxu0 %v1164
    %v1166 = vand.u32 %v843, 4294901760
    %v1167 = vsub.f32 %v843, %v1166
    %v1168 = vand.u32 %v1167, 4294901760
    %1169 = vmatpush.msra.mxu0 %v1168
    %v1170 = vand.u32 %v842, 4294901760
    %v1171 = vsub.f32 %v842, %v1170
    %v1172 = vand.u32 %v1171, 4294901760
    %1173 = vmatpush.msra.mxu0 %v1172
    %v1174 = vand.u32 %v841, 4294901760
    %v1175 = vsub.f32 %v841, %v1174
    %v1176 = vand.u32 %v1175, 4294901760
    %1177 = vmatpush.msra.mxu0 %v1176
    %v1178 = vand.u32 %v840, 4294901760
    %v1179 = vsub.f32 %v840, %v1178
    %v1180 = vand.u32 %v1179, 4294901760
    %1181 = vmatpush.msra.mxu0 %v1180
    %v1182 = vand.u32 %v838, 4294901760
    %1183 = vmatmul.f32.gmra.mxu0 %v1182
    %v1184 = vpop.f32.mrf.mxu0
    %v1185 = vadd.f32 %v1110, %v1184
    %v1186 = vand.u32 %v839, 4294901760
    %1187 = vmatmul.f32.gmra.mxu0 %v1186
    %v1188 = vpop.f32.mrf.mxu0
    %v1189 = vadd.f32 %v1116, %v1188
    %1190 = vdwg.mxu0
    %v1191 = vand.u32 %v855, 4294901760
    %1192 = vmatpush.msra.mxu0 %v1191
    %v1193 = vand.u32 %v854, 4294901760
    %1194 = vmatpush.msra.mxu0 %v1193
    %v1195 = vand.u32 %v853, 4294901760
    %1196 = vmatpush.msra.mxu0 %v1195
    %v1197 = vand.u32 %v852, 4294901760
    %1198 = vmatpush.msra.mxu0 %v1197
    %v1199 = vand.u32 %v851, 4294901760
    %1200 = vmatpush.msra.mxu0 %v1199
    %v1201 = vand.u32 %v850, 4294901760
    %1202 = vmatpush.msra.mxu0 %v1201
    %v1203 = vand.u32 %v849, 4294901760
    %1204 = vmatpush.msra.mxu0 %v1203
    %v1205 = vand.u32 %v848, 4294901760
    %1206 = vmatpush.msra.mxu0 %v1205
    %v1207 = vand.u32 %v847, 4294901760
    %1208 = vmatpush.msra.mxu0 %v1207
    %v1209 = vand.u32 %v846, 4294901760
    %1210 = vmatpush.msra.mxu0 %v1209
    %v1211 = vand.u32 %v845, 4294901760
    %1212 = vmatpush.msra.mxu0 %v1211
    %v1213 = vand.u32 %v844, 4294901760
    %1214 = vmatpush.msra.mxu0 %v1213
    %v1215 = vand.u32 %v843, 4294901760
    %1216 = vmatpush.msra.mxu0 %v1215
    %v1217 = vand.u32 %v842, 4294901760
    %1218 = vmatpush.msra.mxu0 %v1217
    %v1219 = vand.u32 %v841, 4294901760
    %1220 = vmatpush.msra.mxu0 %v1219
    %v1221 = vand.u32 %v840, 4294901760
    %1222 = vmatpush.msra.mxu0 %v1221
    %v1223 = vand.u32 %v838, 4294901760
    %1224 = vmatmul.f32.gmra.mxu0 %v1223
    %v1225 = vpop.f32.mrf.mxu0
    %v1226 = vadd.f32 %v1185, %v1225
    %v1227 = vand.u32 %v839, 4294901760
    %1228 = vmatmul.f32.gmra.mxu0 %v1227
    %v1229 = vpop.f32.mrf.mxu0
    %v1230 = vadd.f32 %v1189, %v1229
    %1231 = vdwg.mxu0
    %1232 = vst [vmem:[%s5] sm:$0xff] %v1226
    %1233 = vst [vmem:[%s5 + $0x8] sm:$0xff] %v1230
    // Predicated region
    $region30: #{_reglu_apply.1} parent=1 // pred_check
      _
    $region31: #{_reglu_apply.1} parent=1 // pred_check_branch
      %1235 = sbr.rel (0) target = $region33
    $region32: #{_reglu_apply.1} parent=1 // pred_region
      _
    $region33: #{_reglu_apply.1} parent=1 // pred_fallthru
      _
    // Predicated region
    $region34: #{_reglu_apply.1} parent=1 // pred_check
      _
    $region35: #{_reglu_apply.1} parent=1 // pred_check_branch
      %1237 = sbr.rel (0) target = $region37
    $region36: #{_reglu_apply.1} parent=1 // pred_region
      _
    $region37: #{_reglu_apply.1} parent=1 // pred_fallthru
      _
    %1238 = vsyncpa [#allocation3], 1
    %1239 = vsyncpa [#allocation5], 1

</llo_original>
